<compile_context>
chip_gen: v5e
topology: v5e:2x2
jax: 0.10.0
libtpu: 0.0.40
codegen_flags: <defaults>
</compile_context>

<pallas_src>
import jax
import jax.numpy as jnp
from jax.experimental import pallas as pl
from jax.experimental.pallas import tpu as pltpu

_K = 7      # conv kernel size
_PAD = 3    # padding


def _spatial_attention_kernel(x_ref, w_ref, b_ref, o_ref, pad_ref):
    # x_ref  : (1, C, H, W) VMEM   input block (one batch element)
    # w_ref  : (2*7*7,)     SMEM   conv weight, flattened [c, kh, kw]
    # b_ref  : (1,)         SMEM   conv bias
    # o_ref  : (1, C, H, W) VMEM   output block
    # pad_ref: (2, H+6, W+6) VMEM  zero-padded pooled planes (scratch)
    x = x_ref[0].astype(jnp.float32)          # (C, H, W)
    C, H, W = x.shape

    # Channel pooling: reductions over the leading (non-lane) axis -> pure VPU.
    avg = jnp.mean(x, axis=0)                 # (H, W)
    mx = jnp.max(x, axis=0)                   # (H, W)

    # Zero-filled padded planes in VMEM scratch (pad=3 halo folded into kernel).
    pad_ref[...] = jnp.zeros_like(pad_ref)
    pad_ref[0, pl.ds(_PAD, H), pl.ds(_PAD, W)] = avg
    pad_ref[1, pl.ds(_PAD, H), pl.ds(_PAD, W)] = mx

    # 7x7 conv (2 -> 1 channels) as 98 scalar-broadcast FMAs on the VPU.
    acc = jnp.full((H, W), b_ref[0], jnp.float32)
    for c in range(2):
        for kh in range(_K):
            for kw in range(_K):
                tap = pad_ref[c, pl.ds(kh, H), pl.ds(kw, W)]        # (H, W)
                acc = acc + w_ref[(c * _K + kh) * _K + kw] * tap

    # sigmoid (exp goes to the EUP slot) and rescale the full input block.
    attn = 1.0 / (1.0 + jnp.exp(-acc))        # (H, W)
    o_ref[0] = (x * attn[None, :, :]).astype(o_ref.dtype)


def spatial_attention_forward(x, conv_w, conv_b):
    """Pallas implementation of SpatialAttentionModule.forward.

    x      : (N, C, H, W)
    conv_w : (1, 2, 7, 7)   PyTorch Conv2d weight (OIHW)
    conv_b : (1,)           PyTorch Conv2d bias
    returns: (N, C, H, W)
    """
    N, C, H, W = x.shape
    w_flat = conv_w.astype(jnp.float32).reshape(-1)   # (98,) in [c, kh, kw] order
    b_flat = conv_b.astype(jnp.float32).reshape(-1)   # (1,)

    return pl.pallas_call(
        _spatial_attention_kernel,
        out_shape=jax.ShapeDtypeStruct((N, C, H, W), x.dtype),
        grid_spec=pltpu.PrefetchScalarGridSpec(
            num_scalar_prefetch=0,
            grid=(N,),
            in_specs=[
                pl.BlockSpec((1, C, H, W), lambda n: (n, 0, 0, 0)),
                pl.BlockSpec(memory_space=pltpu.MemorySpace.SMEM),   # weights
                pl.BlockSpec(memory_space=pltpu.MemorySpace.SMEM),   # bias
            ],
            out_specs=pl.BlockSpec((1, C, H, W), lambda n: (n, 0, 0, 0)),
            scratch_shapes=[
                pltpu.VMEM((2, H + 2 * _PAD, W + 2 * _PAD), jnp.float32),
            ],
        ),
        compiler_params=pltpu.CompilerParams(
            dimension_semantics=("parallel",),
        ),
    )(x, w_flat, b_flat)


def _reference_spatial_attention(x, conv_w, conv_b):
    """Pure-JAX reference mirroring the PyTorch forward."""
    avg = jnp.mean(x, axis=1, keepdims=True)
    mx = jnp.max(x, axis=1, keepdims=True)
    cat = jnp.concatenate([avg, mx], axis=1)              # (N, 2, H, W)
    dn = jax.lax.conv_dimension_numbers(cat.shape, conv_w.shape,
                                        ("NCHW", "OIHW", "NCHW"))
    conv = jax.lax.conv_general_dilated(
        cat, conv_w, window_strides=(1, 1),
        padding=((_PAD, _PAD), (_PAD, _PAD)), dimension_numbers=dn)
    attn = jax.nn.sigmoid(conv + conv_b.reshape(1, -1, 1, 1))
    return attn * x


if __name__ == "__main__":
    # Small shapes consistent with the module: batch=2, channels=4, spatial=16.
    N, C, H, W = 2, 4, 16, 16

    key = jax.random.PRNGKey(0)
    kx, kw, kb = jax.random.split(key, 3)
    x = jax.random.normal(kx, (N, C, H, W), dtype=jnp.float32)
    conv_w = jax.random.normal(kw, (1, 2, _K, _K), dtype=jnp.float32) * 0.1
    conv_b = jax.random.normal(kb, (1,), dtype=jnp.float32) * 0.1

    out = jax.block_until_ready(spatial_attention_forward(x, conv_w, conv_b))
    ref = jax.block_until_ready(_reference_spatial_attention(x, conv_w, conv_b))

    assert out.shape == ref.shape, (out.shape, ref.shape)
    err = float(jnp.max(jnp.abs(out - ref)))
    assert err < 1e-4, err
    print("KERNEL_OK")
</pallas_src>

<mosaic_0001>
module attributes {stable_mosaic.version = 11 : i64} {
  func.func @_spatial_attention_kernel(%arg0: i32, %arg1: memref<1x4x16x16xf32, #tpu.memory_space<vmem>>, %arg2: memref<98xf32, #tpu.memory_space<smem>>, %arg3: memref<1xf32, #tpu.memory_space<smem>>, %arg4: memref<1x4x16x16xf32, #tpu.memory_space<vmem>>, %arg5: memref<2x22x22xf32, #tpu.memory_space<vmem>>) attributes {dimension_semantics = [#tpu.dimension_semantics<parallel>], iteration_bounds = array<i64: 2>, scalar_prefetch = 0 : i64, scratch_operands = 1 : i64, tpu.core_type = #tpu.core_type<tc>, window_params = [{transform_indices = @transform_0, window_bounds = array<i64: 1, 4, 16, 16>}, {transform_indices = @transform_1, window_bounds = array<i64: 98>}, {transform_indices = @transform_2, window_bounds = array<i64: 1>}, {transform_indices = @transform_3, window_bounds = array<i64: 1, 4, 16, 16>}]} {
    %c0 = arith.constant 0 : index
    %c0_0 = arith.constant 0 : index
    %c0_1 = arith.constant 0 : index
    %c0_2 = arith.constant 0 : index
    %0 = vector.load %arg1[%c0, %c0_0, %c0_1, %c0_2] : memref<1x4x16x16xf32, #tpu.memory_space<vmem>>, vector<1x4x16x16xf32>
    %1 = vector.shape_cast %0 : vector<1x4x16x16xf32> to vector<4x16x16xf32>
    %cst = arith.constant dense<0.000000e+00> : vector<16x16xf32>
    %2 = vector.multi_reduction <add>, %1, %cst [0] : vector<4x16x16xf32> to vector<16x16xf32>
    %cst_3 = arith.constant 4.000000e+00 : f32
    %3 = vector.broadcast %cst_3 : f32 to vector<16x16xf32>
    %4 = arith.divf %2, %3 : vector<16x16xf32>
    %cst_4 = arith.constant dense<0xFF800000> : vector<16x16xf32>
    %5 = vector.multi_reduction <maximumf>, %1, %cst_4 [0] : vector<4x16x16xf32> to vector<16x16xf32>
    %cst_5 = arith.constant 0.000000e+00 : f32
    %6 = vector.broadcast %cst_5 : f32 to vector<2x22x22xf32>
    %c0_6 = arith.constant 0 : index
    %c0_7 = arith.constant 0 : index
    %c0_8 = arith.constant 0 : index
    %7 = vector.load %arg5[%c0_6, %c0_7, %c0_8] : memref<2x22x22xf32, #tpu.memory_space<vmem>>, vector<2x22x22xf32>
    tpu.vector_store %arg5[%c0_6, %c0_7, %c0_8], %6 {strides = array<i32>} : memref<2x22x22xf32, #tpu.memory_space<vmem>>, vector<2x22x22xf32>,
    %c0_9 = arith.constant 0 : index
    %c3 = arith.constant 3 : index
    %c3_10 = arith.constant 3 : index
    %8 = vector.load %arg5[%c0_9, %c3, %c3_10] : memref<2x22x22xf32, #tpu.memory_space<vmem>>, vector<1x16x16xf32>
    %9 = vector.shape_cast %8 : vector<1x16x16xf32> to vector<16x16xf32>
    %10 = vector.shape_cast %4 : vector<16x16xf32> to vector<1x16x16xf32>
    tpu.vector_store %arg5[%c0_9, %c3, %c3_10], %10 {strides = array<i32>} : memref<2x22x22xf32, #tpu.memory_space<vmem>>, vector<1x16x16xf32>,
    %c1 = arith.constant 1 : index
    %c3_11 = arith.constant 3 : index
    %c3_12 = arith.constant 3 : index
    %11 = vector.load %arg5[%c1, %c3_11, %c3_12] : memref<2x22x22xf32, #tpu.memory_space<vmem>>, vector<1x16x16xf32>
    %12 = vector.shape_cast %11 : vector<1x16x16xf32> to vector<16x16xf32>
    %13 = vector.shape_cast %5 : vector<16x16xf32> to vector<1x16x16xf32>
    tpu.vector_store %arg5[%c1, %c3_11, %c3_12], %13 {strides = array<i32>} : memref<2x22x22xf32, #tpu.memory_space<vmem>>, vector<1x16x16xf32>,
    %c0_13 = arith.constant 0 : index
    %14 = memref.load %arg3[%c0_13] : memref<1xf32, #tpu.memory_space<smem>>
    %15 = vector.broadcast %14 : f32 to vector<16x16xf32>
    %c0_14 = arith.constant 0 : index
    %c0_15 = arith.constant 0 : index
    %c0_16 = arith.constant 0 : index
    %16 = vector.load %arg5[%c0_14, %c0_15, %c0_16] : memref<2x22x22xf32, #tpu.memory_space<vmem>>, vector<1x16x16xf32>
    %17 = vector.shape_cast %16 : vector<1x16x16xf32> to vector<16x16xf32>
    %c0_17 = arith.constant 0 : index
    %18 = memref.load %arg2[%c0_17] : memref<98xf32, #tpu.memory_space<smem>>
    %19 = vector.broadcast %18 : f32 to vector<16x16xf32>
    %20 = arith.mulf %19, %17 : vector<16x16xf32>
    %21 = arith.addf %15, %20 : vector<16x16xf32>
    %c0_18 = arith.constant 0 : index
    %c0_19 = arith.constant 0 : index
    %c1_20 = arith.constant 1 : index
    %22 = vector.load %arg5[%c0_18, %c0_19, %c1_20] : memref<2x22x22xf32, #tpu.memory_space<vmem>>, vector<1x16x16xf32>
    %23 = vector.shape_cast %22 : vector<1x16x16xf32> to vector<16x16xf32>
    %c1_21 = arith.constant 1 : index
    %24 = memref.load %arg2[%c1_21] : memref<98xf32, #tpu.memory_space<smem>>
    %25 = vector.broadcast %24 : f32 to vector<16x16xf32>
    %26 = arith.mulf %25, %23 : vector<16x16xf32>
    %27 = arith.addf %21, %26 : vector<16x16xf32>
    %c0_22 = arith.constant 0 : index
    %c0_23 = arith.constant 0 : index
    %c2 = arith.constant 2 : index
    %28 = vector.load %arg5[%c0_22, %c0_23, %c2] : memref<2x22x22xf32, #tpu.memory_space<vmem>>, vector<1x16x16xf32>
    %29 = vector.shape_cast %28 : vector<1x16x16xf32> to vector<16x16xf32>
    %c2_24 = arith.constant 2 : index
    %30 = memref.load %arg2[%c2_24] : memref<98xf32, #tpu.memory_space<smem>>
    %31 = vector.broadcast %30 : f32 to vector<16x16xf32>
    %32 = arith.mulf %31, %29 : vector<16x16xf32>
    %33 = arith.addf %27, %32 : vector<16x16xf32>
    %c0_25 = arith.constant 0 : index
    %c0_26 = arith.constant 0 : index
    %c3_27 = arith.constant 3 : index
    %34 = vector.load %arg5[%c0_25, %c0_26, %c3_27] : memref<2x22x22xf32, #tpu.memory_space<vmem>>, vector<1x16x16xf32>
    %35 = vector.shape_cast %34 : vector<1x16x16xf32> to vector<16x16xf32>
    %c3_28 = arith.constant 3 : index
    %36 = memref.load %arg2[%c3_28] : memref<98xf32, #tpu.memory_space<smem>>
    %37 = vector.broadcast %36 : f32 to vector<16x16xf32>
    %38 = arith.mulf %37, %35 : vector<16x16xf32>
    %39 = arith.addf %33, %38 : vector<16x16xf32>
    %c0_29 = arith.constant 0 : index
    %c0_30 = arith.constant 0 : index
    %c4 = arith.constant 4 : index
    %40 = vector.load %arg5[%c0_29, %c0_30, %c4] : memref<2x22x22xf32, #tpu.memory_space<vmem>>, vector<1x16x16xf32>
    %41 = vector.shape_cast %40 : vector<1x16x16xf32> to vector<16x16xf32>
    %c4_31 = arith.constant 4 : index
    %42 = memref.load %arg2[%c4_31] : memref<98xf32, #tpu.memory_space<smem>>
    %43 = vector.broadcast %42 : f32 to vector<16x16xf32>
    %44 = arith.mulf %43, %41 : vector<16x16xf32>
    %45 = arith.addf %39, %44 : vector<16x16xf32>
    %c0_32 = arith.constant 0 : index
    %c0_33 = arith.constant 0 : index
    %c5 = arith.constant 5 : index
    %46 = vector.load %arg5[%c0_32, %c0_33, %c5] : memref<2x22x22xf32, #tpu.memory_space<vmem>>, vector<1x16x16xf32>
    %47 = vector.shape_cast %46 : vector<1x16x16xf32> to vector<16x16xf32>
    %c5_34 = arith.constant 5 : index
    %48 = memref.load %arg2[%c5_34] : memref<98xf32, #tpu.memory_space<smem>>
    %49 = vector.broadcast %48 : f32 to vector<16x16xf32>
    %50 = arith.mulf %49, %47 : vector<16x16xf32>
    %51 = arith.addf %45, %50 : vector<16x16xf32>
    %c0_35 = arith.constant 0 : index
    %c0_36 = arith.constant 0 : index
    %c6 = arith.constant 6 : index
    %52 = vector.load %arg5[%c0_35, %c0_36, %c6] : memref<2x22x22xf32, #tpu.memory_space<vmem>>, vector<1x16x16xf32>
    %53 = vector.shape_cast %52 : vector<1x16x16xf32> to vector<16x16xf32>
    %c6_37 = arith.constant 6 : index
    %54 = memref.load %arg2[%c6_37] : memref<98xf32, #tpu.memory_space<smem>>
    %55 = vector.broadcast %54 : f32 to vector<16x16xf32>
    %56 = arith.mulf %55, %53 : vector<16x16xf32>
    %57 = arith.addf %51, %56 : vector<16x16xf32>
    %c0_38 = arith.constant 0 : index
    %c1_39 = arith.constant 1 : index
    %c0_40 = arith.constant 0 : index
    %58 = vector.load %arg5[%c0_38, %c1_39, %c0_40] : memref<2x22x22xf32, #tpu.memory_space<vmem>>, vector<1x16x16xf32>
    %59 = vector.shape_cast %58 : vector<1x16x16xf32> to vector<16x16xf32>
    %c7 = arith.constant 7 : index
    %60 = memref.load %arg2[%c7] : memref<98xf32, #tpu.memory_space<smem>>
    %61 = vector.broadcast %60 : f32 to vector<16x16xf32>
    %62 = arith.mulf %61, %59 : vector<16x16xf32>
    %63 = arith.addf %57, %62 : vector<16x16xf32>
    %c0_41 = arith.constant 0 : index
    %c1_42 = arith.constant 1 : index
    %c1_43 = arith.constant 1 : index
    %64 = vector.load %arg5[%c0_41, %c1_42, %c1_43] : memref<2x22x22xf32, #tpu.memory_space<vmem>>, vector<1x16x16xf32>
    %65 = vector.shape_cast %64 : vector<1x16x16xf32> to vector<16x16xf32>
    %c8 = arith.constant 8 : index
    %66 = memref.load %arg2[%c8] : memref<98xf32, #tpu.memory_space<smem>>
    %67 = vector.broadcast %66 : f32 to vector<16x16xf32>
    %68 = arith.mulf %67, %65 : vector<16x16xf32>
    %69 = arith.addf %63, %68 : vector<16x16xf32>
    %c0_44 = arith.constant 0 : index
    %c1_45 = arith.constant 1 : index
    %c2_46 = arith.constant 2 : index
    %70 = vector.load %arg5[%c0_44, %c1_45, %c2_46] : memref<2x22x22xf32, #tpu.memory_space<vmem>>, vector<1x16x16xf32>
    %71 = vector.shape_cast %70 : vector<1x16x16xf32> to vector<16x16xf32>
    %c9 = arith.constant 9 : index
    %72 = memref.load %arg2[%c9] : memref<98xf32, #tpu.memory_space<smem>>
    %73 = vector.broadcast %72 : f32 to vector<16x16xf32>
    %74 = arith.mulf %73, %71 : vector<16x16xf32>
    %75 = arith.addf %69, %74 : vector<16x16xf32>
    %c0_47 = arith.constant 0 : index
    %c1_48 = arith.constant 1 : index
    %c3_49 = arith.constant 3 : index
    %76 = vector.load %arg5[%c0_47, %c1_48, %c3_49] : memref<2x22x22xf32, #tpu.memory_space<vmem>>, vector<1x16x16xf32>
    %77 = vector.shape_cast %76 : vector<1x16x16xf32> to vector<16x16xf32>
    %c10 = arith.constant 10 : index
    %78 = memref.load %arg2[%c10] : memref<98xf32, #tpu.memory_space<smem>>
    %79 = vector.broadcast %78 : f32 to vector<16x16xf32>
    %80 = arith.mulf %79, %77 : vector<16x16xf32>
    %81 = arith.addf %75, %80 : vector<16x16xf32>
    %c0_50 = arith.constant 0 : index
    %c1_51 = arith.constant 1 : index
    %c4_52 = arith.constant 4 : index
    %82 = vector.load %arg5[%c0_50, %c1_51, %c4_52] : memref<2x22x22xf32, #tpu.memory_space<vmem>>, vector<1x16x16xf32>
    %83 = vector.shape_cast %82 : vector<1x16x16xf32> to vector<16x16xf32>
    %c11 = arith.constant 11 : index
    %84 = memref.load %arg2[%c11] : memref<98xf32, #tpu.memory_space<smem>>
    %85 = vector.broadcast %84 : f32 to vector<16x16xf32>
    %86 = arith.mulf %85, %83 : vector<16x16xf32>
    %87 = arith.addf %81, %86 : vector<16x16xf32>
    %c0_53 = arith.constant 0 : index
    %c1_54 = arith.constant 1 : index
    %c5_55 = arith.constant 5 : index
    %88 = vector.load %arg5[%c0_53, %c1_54, %c5_55] : memref<2x22x22xf32, #tpu.memory_space<vmem>>, vector<1x16x16xf32>
    %89 = vector.shape_cast %88 : vector<1x16x16xf32> to vector<16x16xf32>
    %c12 = arith.constant 12 : index
    %90 = memref.load %arg2[%c12] : memref<98xf32, #tpu.memory_space<smem>>
    %91 = vector.broadcast %90 : f32 to vector<16x16xf32>
    %92 = arith.mulf %91, %89 : vector<16x16xf32>
    %93 = arith.addf %87, %92 : vector<16x16xf32>
    %c0_56 = arith.constant 0 : index
    %c1_57 = arith.constant 1 : index
    %c6_58 = arith.constant 6 : index
    %94 = vector.load %arg5[%c0_56, %c1_57, %c6_58] : memref<2x22x22xf32, #tpu.memory_space<vmem>>, vector<1x16x16xf32>
    %95 = vector.shape_cast %94 : vector<1x16x16xf32> to vector<16x16xf32>
    %c13 = arith.constant 13 : index
    %96 = memref.load %arg2[%c13] : memref<98xf32, #tpu.memory_space<smem>>
    %97 = vector.broadcast %96 : f32 to vector<16x16xf32>
    %98 = arith.mulf %97, %95 : vector<16x16xf32>
    %99 = arith.addf %93, %98 : vector<16x16xf32>
    %c0_59 = arith.constant 0 : index
    %c2_60 = arith.constant 2 : index
    %c0_61 = arith.constant 0 : index
    %100 = vector.load %arg5[%c0_59, %c2_60, %c0_61] : memref<2x22x22xf32, #tpu.memory_space<vmem>>, vector<1x16x16xf32>
    %101 = vector.shape_cast %100 : vector<1x16x16xf32> to vector<16x16xf32>
    %c14 = arith.constant 14 : index
    %102 = memref.load %arg2[%c14] : memref<98xf32, #tpu.memory_space<smem>>
    %103 = vector.broadcast %102 : f32 to vector<16x16xf32>
    %104 = arith.mulf %103, %101 : vector<16x16xf32>
    %105 = arith.addf %99, %104 : vector<16x16xf32>
    %c0_62 = arith.constant 0 : index
    %c2_63 = arith.constant 2 : index
    %c1_64 = arith.constant 1 : index
    %106 = vector.load %arg5[%c0_62, %c2_63, %c1_64] : memref<2x22x22xf32, #tpu.memory_space<vmem>>, vector<1x16x16xf32>
    %107 = vector.shape_cast %106 : vector<1x16x16xf32> to vector<16x16xf32>
    %c15 = arith.constant 15 : index
    %108 = memref.load %arg2[%c15] : memref<98xf32, #tpu.memory_space<smem>>
    %109 = vector.broadcast %108 : f32 to vector<16x16xf32>
    %110 = arith.mulf %109, %107 : vector<16x16xf32>
    %111 = arith.addf %105, %110 : vector<16x16xf32>
    %c0_65 = arith.constant 0 : index
    %c2_66 = arith.constant 2 : index
    %c2_67 = arith.constant 2 : index
    %112 = vector.load %arg5[%c0_65, %c2_66, %c2_67] : memref<2x22x22xf32, #tpu.memory_space<vmem>>, vector<1x16x16xf32>
    %113 = vector.shape_cast %112 : vector<1x16x16xf32> to vector<16x16xf32>
    %c16 = arith.constant 16 : index
    %114 = memref.load %arg2[%c16] : memref<98xf32, #tpu.memory_space<smem>>
    %115 = vector.broadcast %114 : f32 to vector<16x16xf32>
    %116 = arith.mulf %115, %113 : vector<16x16xf32>
    %117 = arith.addf %111, %116 : vector<16x16xf32>
    %c0_68 = arith.constant 0 : index
    %c2_69 = arith.constant 2 : index
    %c3_70 = arith.constant 3 : index
    %118 = vector.load %arg5[%c0_68, %c2_69, %c3_70] : memref<2x22x22xf32, #tpu.memory_space<vmem>>, vector<1x16x16xf32>
    %119 = vector.shape_cast %118 : vector<1x16x16xf32> to vector<16x16xf32>
    %c17 = arith.constant 17 : index
    %120 = memref.load %arg2[%c17] : memref<98xf32, #tpu.memory_space<smem>>
    %121 = vector.broadcast %120 : f32 to vector<16x16xf32>
    %122 = arith.mulf %121, %119 : vector<16x16xf32>
    %123 = arith.addf %117, %122 : vector<16x16xf32>
    %c0_71 = arith.constant 0 : index
    %c2_72 = arith.constant 2 : index
    %c4_73 = arith.constant 4 : index
    %124 = vector.load %arg5[%c0_71, %c2_72, %c4_73] : memref<2x22x22xf32, #tpu.memory_space<vmem>>, vector<1x16x16xf32>
    %125 = vector.shape_cast %124 : vector<1x16x16xf32> to vector<16x16xf32>
    %c18 = arith.constant 18 : index
    %126 = memref.load %arg2[%c18] : memref<98xf32, #tpu.memory_space<smem>>
    %127 = vector.broadcast %126 : f32 to vector<16x16xf32>
    %128 = arith.mulf %127, %125 : vector<16x16xf32>
    %129 = arith.addf %123, %128 : vector<16x16xf32>
    %c0_74 = arith.constant 0 : index
    %c2_75 = arith.constant 2 : index
    %c5_76 = arith.constant 5 : index
    %130 = vector.load %arg5[%c0_74, %c2_75, %c5_76] : memref<2x22x22xf32, #tpu.memory_space<vmem>>, vector<1x16x16xf32>
    %131 = vector.shape_cast %130 : vector<1x16x16xf32> to vector<16x16xf32>
    %c19 = arith.constant 19 : index
    %132 = memref.load %arg2[%c19] : memref<98xf32, #tpu.memory_space<smem>>
    %133 = vector.broadcast %132 : f32 to vector<16x16xf32>
    %134 = arith.mulf %133, %131 : vector<16x16xf32>
    %135 = arith.addf %129, %134 : vector<16x16xf32>
    %c0_77 = arith.constant 0 : index
    %c2_78 = arith.constant 2 : index
    %c6_79 = arith.constant 6 : index
    %136 = vector.load %arg5[%c0_77, %c2_78, %c6_79] : memref<2x22x22xf32, #tpu.memory_space<vmem>>, vector<1x16x16xf32>
    %137 = vector.shape_cast %136 : vector<1x16x16xf32> to vector<16x16xf32>
    %c20 = arith.constant 20 : index
    %138 = memref.load %arg2[%c20] : memref<98xf32, #tpu.memory_space<smem>>
    %139 = vector.broadcast %138 : f32 to vector<16x16xf32>
    %140 = arith.mulf %139, %137 : vector<16x16xf32>
    %141 = arith.addf %135, %140 : vector<16x16xf32>
    %c0_80 = arith.constant 0 : index
    %c3_81 = arith.constant 3 : index
    %c0_82 = arith.constant 0 : index
    %142 = vector.load %arg5[%c0_80, %c3_81, %c0_82] : memref<2x22x22xf32, #tpu.memory_space<vmem>>, vector<1x16x16xf32>
    %143 = vector.shape_cast %142 : vector<1x16x16xf32> to vector<16x16xf32>
    %c21 = arith.constant 21 : index
    %144 = memref.load %arg2[%c21] : memref<98xf32, #tpu.memory_space<smem>>
    %145 = vector.broadcast %144 : f32 to vector<16x16xf32>
    %146 = arith.mulf %145, %143 : vector<16x16xf32>
    %147 = arith.addf %141, %146 : vector<16x16xf32>
    %c0_83 = arith.constant 0 : index
    %c3_84 = arith.constant 3 : index
    %c1_85 = arith.constant 1 : index
    %148 = vector.load %arg5[%c0_83, %c3_84, %c1_85] : memref<2x22x22xf32, #tpu.memory_space<vmem>>, vector<1x16x16xf32>
    %149 = vector.shape_cast %148 : vector<1x16x16xf32> to vector<16x16xf32>
    %c22 = arith.constant 22 : index
    %150 = memref.load %arg2[%c22] : memref<98xf32, #tpu.memory_space<smem>>
    %151 = vector.broadcast %150 : f32 to vector<16x16xf32>
    %152 = arith.mulf %151, %149 : vector<16x16xf32>
    %153 = arith.addf %147, %152 : vector<16x16xf32>
    %c0_86 = arith.constant 0 : index
    %c3_87 = arith.constant 3 : index
    %c2_88 = arith.constant 2 : index
    %154 = vector.load %arg5[%c0_86, %c3_87, %c2_88] : memref<2x22x22xf32, #tpu.memory_space<vmem>>, vector<1x16x16xf32>
    %155 = vector.shape_cast %154 : vector<1x16x16xf32> to vector<16x16xf32>
    %c23 = arith.constant 23 : index
    %156 = memref.load %arg2[%c23] : memref<98xf32, #tpu.memory_space<smem>>
    %157 = vector.broadcast %156 : f32 to vector<16x16xf32>
    %158 = arith.mulf %157, %155 : vector<16x16xf32>
    %159 = arith.addf %153, %158 : vector<16x16xf32>
    %c0_89 = arith.constant 0 : index
    %c3_90 = arith.constant 3 : index
    %c3_91 = arith.constant 3 : index
    %160 = vector.load %arg5[%c0_89, %c3_90, %c3_91] : memref<2x22x22xf32, #tpu.memory_space<vmem>>, vector<1x16x16xf32>
    %161 = vector.shape_cast %160 : vector<1x16x16xf32> to vector<16x16xf32>
    %c24 = arith.constant 24 : index
    %162 = memref.load %arg2[%c24] : memref<98xf32, #tpu.memory_space<smem>>
    %163 = vector.broadcast %162 : f32 to vector<16x16xf32>
    %164 = arith.mulf %163, %161 : vector<16x16xf32>
    %165 = arith.addf %159, %164 : vector<16x16xf32>
    %c0_92 = arith.constant 0 : index
    %c3_93 = arith.constant 3 : index
    %c4_94 = arith.constant 4 : index
    %166 = vector.load %arg5[%c0_92, %c3_93, %c4_94] : memref<2x22x22xf32, #tpu.memory_space<vmem>>, vector<1x16x16xf32>
    %167 = vector.shape_cast %166 : vector<1x16x16xf32> to vector<16x16xf32>
    %c25 = arith.constant 25 : index
    %168 = memref.load %arg2[%c25] : memref<98xf32, #tpu.memory_space<smem>>
    %169 = vector.broadcast %168 : f32 to vector<16x16xf32>
    %170 = arith.mulf %169, %167 : vector<16x16xf32>
    %171 = arith.addf %165, %170 : vector<16x16xf32>
    %c0_95 = arith.constant 0 : index
    %c3_96 = arith.constant 3 : index
    %c5_97 = arith.constant 5 : index
    %172 = vector.load %arg5[%c0_95, %c3_96, %c5_97] : memref<2x22x22xf32, #tpu.memory_space<vmem>>, vector<1x16x16xf32>
    %173 = vector.shape_cast %172 : vector<1x16x16xf32> to vector<16x16xf32>
    %c26 = arith.constant 26 : index
    %174 = memref.load %arg2[%c26] : memref<98xf32, #tpu.memory_space<smem>>
    %175 = vector.broadcast %174 : f32 to vector<16x16xf32>
    %176 = arith.mulf %175, %173 : vector<16x16xf32>
    %177 = arith.addf %171, %176 : vector<16x16xf32>
    %c0_98 = arith.constant 0 : index
    %c3_99 = arith.constant 3 : index
    %c6_100 = arith.constant 6 : index
    %178 = vector.load %arg5[%c0_98, %c3_99, %c6_100] : memref<2x22x22xf32, #tpu.memory_space<vmem>>, vector<1x16x16xf32>
    %179 = vector.shape_cast %178 : vector<1x16x16xf32> to vector<16x16xf32>
    %c27 = arith.constant 27 : index
    %180 = memref.load %arg2[%c27] : memref<98xf32, #tpu.memory_space<smem>>
    %181 = vector.broadcast %180 : f32 to vector<16x16xf32>
    %182 = arith.mulf %181, %179 : vector<16x16xf32>
    %183 = arith.addf %177, %182 : vector<16x16xf32>
    %c0_101 = arith.constant 0 : index
    %c4_102 = arith.constant 4 : index
    %c0_103 = arith.constant 0 : index
    %184 = vector.load %arg5[%c0_101, %c4_102, %c0_103] : memref<2x22x22xf32, #tpu.memory_space<vmem>>, vector<1x16x16xf32>
    %185 = vector.shape_cast %184 : vector<1x16x16xf32> to vector<16x16xf32>
    %c28 = arith.constant 28 : index
    %186 = memref.load %arg2[%c28] : memref<98xf32, #tpu.memory_space<smem>>
    %187 = vector.broadcast %186 : f32 to vector<16x16xf32>
    %188 = arith.mulf %187, %185 : vector<16x16xf32>
    %189 = arith.addf %183, %188 : vector<16x16xf32>
    %c0_104 = arith.constant 0 : index
    %c4_105 = arith.constant 4 : index
    %c1_106 = arith.constant 1 : index
    %190 = vector.load %arg5[%c0_104, %c4_105, %c1_106] : memref<2x22x22xf32, #tpu.memory_space<vmem>>, vector<1x16x16xf32>
    %191 = vector.shape_cast %190 : vector<1x16x16xf32> to vector<16x16xf32>
    %c29 = arith.constant 29 : index
    %192 = memref.load %arg2[%c29] : memref<98xf32, #tpu.memory_space<smem>>
    %193 = vector.broadcast %192 : f32 to vector<16x16xf32>
    %194 = arith.mulf %193, %191 : vector<16x16xf32>
    %195 = arith.addf %189, %194 : vector<16x16xf32>
    %c0_107 = arith.constant 0 : index
    %c4_108 = arith.constant 4 : index
    %c2_109 = arith.constant 2 : index
    %196 = vector.load %arg5[%c0_107, %c4_108, %c2_109] : memref<2x22x22xf32, #tpu.memory_space<vmem>>, vector<1x16x16xf32>
    %197 = vector.shape_cast %196 : vector<1x16x16xf32> to vector<16x16xf32>
    %c30 = arith.constant 30 : index
    %198 = memref.load %arg2[%c30] : memref<98xf32, #tpu.memory_space<smem>>
    %199 = vector.broadcast %198 : f32 to vector<16x16xf32>
    %200 = arith.mulf %199, %197 : vector<16x16xf32>
    %201 = arith.addf %195, %200 : vector<16x16xf32>
    %c0_110 = arith.constant 0 : index
    %c4_111 = arith.constant 4 : index
    %c3_112 = arith.constant 3 : index
    %202 = vector.load %arg5[%c0_110, %c4_111, %c3_112] : memref<2x22x22xf32, #tpu.memory_space<vmem>>, vector<1x16x16xf32>
    %203 = vector.shape_cast %202 : vector<1x16x16xf32> to vector<16x16xf32>
    %c31 = arith.constant 31 : index
    %204 = memref.load %arg2[%c31] : memref<98xf32, #tpu.memory_space<smem>>
    %205 = vector.broadcast %204 : f32 to vector<16x16xf32>
    %206 = arith.mulf %205, %203 : vector<16x16xf32>
    %207 = arith.addf %201, %206 : vector<16x16xf32>
    %c0_113 = arith.constant 0 : index
    %c4_114 = arith.constant 4 : index
    %c4_115 = arith.constant 4 : index
    %208 = vector.load %arg5[%c0_113, %c4_114, %c4_115] : memref<2x22x22xf32, #tpu.memory_space<vmem>>, vector<1x16x16xf32>
    %209 = vector.shape_cast %208 : vector<1x16x16xf32> to vector<16x16xf32>
    %c32 = arith.constant 32 : index
    %210 = memref.load %arg2[%c32] : memref<98xf32, #tpu.memory_space<smem>>
    %211 = vector.broadcast %210 : f32 to vector<16x16xf32>
    %212 = arith.mulf %211, %209 : vector<16x16xf32>
    %213 = arith.addf %207, %212 : vector<16x16xf32>
    %c0_116 = arith.constant 0 : index
    %c4_117 = arith.constant 4 : index
    %c5_118 = arith.constant 5 : index
    %214 = vector.load %arg5[%c0_116, %c4_117, %c5_118] : memref<2x22x22xf32, #tpu.memory_space<vmem>>, vector<1x16x16xf32>
    %215 = vector.shape_cast %214 : vector<1x16x16xf32> to vector<16x16xf32>
    %c33 = arith.constant 33 : index
    %216 = memref.load %arg2[%c33] : memref<98xf32, #tpu.memory_space<smem>>
    %217 = vector.broadcast %216 : f32 to vector<16x16xf32>
    %218 = arith.mulf %217, %215 : vector<16x16xf32>
    %219 = arith.addf %213, %218 : vector<16x16xf32>
    %c0_119 = arith.constant 0 : index
    %c4_120 = arith.constant 4 : index
    %c6_121 = arith.constant 6 : index
    %220 = vector.load %arg5[%c0_119, %c4_120, %c6_121] : memref<2x22x22xf32, #tpu.memory_space<vmem>>, vector<1x16x16xf32>
    %221 = vector.shape_cast %220 : vector<1x16x16xf32> to vector<16x16xf32>
    %c34 = arith.constant 34 : index
    %222 = memref.load %arg2[%c34] : memref<98xf32, #tpu.memory_space<smem>>
    %223 = vector.broadcast %222 : f32 to vector<16x16xf32>
    %224 = arith.mulf %223, %221 : vector<16x16xf32>
    %225 = arith.addf %219, %224 : vector<16x16xf32>
    %c0_122 = arith.constant 0 : index
    %c5_123 = arith.constant 5 : index
    %c0_124 = arith.constant 0 : index
    %226 = vector.load %arg5[%c0_122, %c5_123, %c0_124] : memref<2x22x22xf32, #tpu.memory_space<vmem>>, vector<1x16x16xf32>
    %227 = vector.shape_cast %226 : vector<1x16x16xf32> to vector<16x16xf32>
    %c35 = arith.constant 35 : index
    %228 = memref.load %arg2[%c35] : memref<98xf32, #tpu.memory_space<smem>>
    %229 = vector.broadcast %228 : f32 to vector<16x16xf32>
    %230 = arith.mulf %229, %227 : vector<16x16xf32>
    %231 = arith.addf %225, %230 : vector<16x16xf32>
    %c0_125 = arith.constant 0 : index
    %c5_126 = arith.constant 5 : index
    %c1_127 = arith.constant 1 : index
    %232 = vector.load %arg5[%c0_125, %c5_126, %c1_127] : memref<2x22x22xf32, #tpu.memory_space<vmem>>, vector<1x16x16xf32>
    %233 = vector.shape_cast %232 : vector<1x16x16xf32> to vector<16x16xf32>
    %c36 = arith.constant 36 : index
    %234 = memref.load %arg2[%c36] : memref<98xf32, #tpu.memory_space<smem>>
    %235 = vector.broadcast %234 : f32 to vector<16x16xf32>
    %236 = arith.mulf %235, %233 : vector<16x16xf32>
    %237 = arith.addf %231, %236 : vector<16x16xf32>
    %c0_128 = arith.constant 0 : index
    %c5_129 = arith.constant 5 : index
    %c2_130 = arith.constant 2 : index
    %238 = vector.load %arg5[%c0_128, %c5_129, %c2_130] : memref<2x22x22xf32, #tpu.memory_space<vmem>>, vector<1x16x16xf32>
    %239 = vector.shape_cast %238 : vector<1x16x16xf32> to vector<16x16xf32>
    %c37 = arith.constant 37 : index
    %240 = memref.load %arg2[%c37] : memref<98xf32, #tpu.memory_space<smem>>
    %241 = vector.broadcast %240 : f32 to vector<16x16xf32>
    %242 = arith.mulf %241, %239 : vector<16x16xf32>
    %243 = arith.addf %237, %242 : vector<16x16xf32>
    %c0_131 = arith.constant 0 : index
    %c5_132 = arith.constant 5 : index
    %c3_133 = arith.constant 3 : index
    %244 = vector.load %arg5[%c0_131, %c5_132, %c3_133] : memref<2x22x22xf32, #tpu.memory_space<vmem>>, vector<1x16x16xf32>
    %245 = vector.shape_cast %244 : vector<1x16x16xf32> to vector<16x16xf32>
    %c38 = arith.constant 38 : index
    %246 = memref.load %arg2[%c38] : memref<98xf32, #tpu.memory_space<smem>>
    %247 = vector.broadcast %246 : f32 to vector<16x16xf32>
    %248 = arith.mulf %247, %245 : vector<16x16xf32>
    %249 = arith.addf %243, %248 : vector<16x16xf32>
    %c0_134 = arith.constant 0 : index
    %c5_135 = arith.constant 5 : index
    %c4_136 = arith.constant 4 : index
    %250 = vector.load %arg5[%c0_134, %c5_135, %c4_136] : memref<2x22x22xf32, #tpu.memory_space<vmem>>, vector<1x16x16xf32>
    %251 = vector.shape_cast %250 : vector<1x16x16xf32> to vector<16x16xf32>
    %c39 = arith.constant 39 : index
    %252 = memref.load %arg2[%c39] : memref<98xf32, #tpu.memory_space<smem>>
    %253 = vector.broadcast %252 : f32 to vector<16x16xf32>
    %254 = arith.mulf %253, %251 : vector<16x16xf32>
    %255 = arith.addf %249, %254 : vector<16x16xf32>
    %c0_137 = arith.constant 0 : index
    %c5_138 = arith.constant 5 : index
    %c5_139 = arith.constant 5 : index
    %256 = vector.load %arg5[%c0_137, %c5_138, %c5_139] : memref<2x22x22xf32, #tpu.memory_space<vmem>>, vector<1x16x16xf32>
    %257 = vector.shape_cast %256 : vector<1x16x16xf32> to vector<16x16xf32>
    %c40 = arith.constant 40 : index
    %258 = memref.load %arg2[%c40] : memref<98xf32, #tpu.memory_space<smem>>
    %259 = vector.broadcast %258 : f32 to vector<16x16xf32>
    %260 = arith.mulf %259, %257 : vector<16x16xf32>
    %261 = arith.addf %255, %260 : vector<16x16xf32>
    %c0_140 = arith.constant 0 : index
    %c5_141 = arith.constant 5 : index
    %c6_142 = arith.constant 6 : index
    %262 = vector.load %arg5[%c0_140, %c5_141, %c6_142] : memref<2x22x22xf32, #tpu.memory_space<vmem>>, vector<1x16x16xf32>
    %263 = vector.shape_cast %262 : vector<1x16x16xf32> to vector<16x16xf32>
    %c41 = arith.constant 41 : index
    %264 = memref.load %arg2[%c41] : memref<98xf32, #tpu.memory_space<smem>>
    %265 = vector.broadcast %264 : f32 to vector<16x16xf32>
    %266 = arith.mulf %265, %263 : vector<16x16xf32>
    %267 = arith.addf %261, %266 : vector<16x16xf32>
    %c0_143 = arith.constant 0 : index
    %c6_144 = arith.constant 6 : index
    %c0_145 = arith.constant 0 : index
    %268 = vector.load %arg5[%c0_143, %c6_144, %c0_145] : memref<2x22x22xf32, #tpu.memory_space<vmem>>, vector<1x16x16xf32>
    %269 = vector.shape_cast %268 : vector<1x16x16xf32> to vector<16x16xf32>
    %c42 = arith.constant 42 : index
    %270 = memref.load %arg2[%c42] : memref<98xf32, #tpu.memory_space<smem>>
    %271 = vector.broadcast %270 : f32 to vector<16x16xf32>
    %272 = arith.mulf %271, %269 : vector<16x16xf32>
    %273 = arith.addf %267, %272 : vector<16x16xf32>
    %c0_146 = arith.constant 0 : index
    %c6_147 = arith.constant 6 : index
    %c1_148 = arith.constant 1 : index
    %274 = vector.load %arg5[%c0_146, %c6_147, %c1_148] : memref<2x22x22xf32, #tpu.memory_space<vmem>>, vector<1x16x16xf32>
    %275 = vector.shape_cast %274 : vector<1x16x16xf32> to vector<16x16xf32>
    %c43 = arith.constant 43 : index
    %276 = memref.load %arg2[%c43] : memref<98xf32, #tpu.memory_space<smem>>
    %277 = vector.broadcast %276 : f32 to vector<16x16xf32>
    %278 = arith.mulf %277, %275 : vector<16x16xf32>
    %279 = arith.addf %273, %278 : vector<16x16xf32>
    %c0_149 = arith.constant 0 : index
    %c6_150 = arith.constant 6 : index
    %c2_151 = arith.constant 2 : index
    %280 = vector.load %arg5[%c0_149, %c6_150, %c2_151] : memref<2x22x22xf32, #tpu.memory_space<vmem>>, vector<1x16x16xf32>
    %281 = vector.shape_cast %280 : vector<1x16x16xf32> to vector<16x16xf32>
    %c44 = arith.constant 44 : index
    %282 = memref.load %arg2[%c44] : memref<98xf32, #tpu.memory_space<smem>>
    %283 = vector.broadcast %282 : f32 to vector<16x16xf32>
    %284 = arith.mulf %283, %281 : vector<16x16xf32>
    %285 = arith.addf %279, %284 : vector<16x16xf32>
    %c0_152 = arith.constant 0 : index
    %c6_153 = arith.constant 6 : index
    %c3_154 = arith.constant 3 : index
    %286 = vector.load %arg5[%c0_152, %c6_153, %c3_154] : memref<2x22x22xf32, #tpu.memory_space<vmem>>, vector<1x16x16xf32>
    %287 = vector.shape_cast %286 : vector<1x16x16xf32> to vector<16x16xf32>
    %c45 = arith.constant 45 : index
    %288 = memref.load %arg2[%c45] : memref<98xf32, #tpu.memory_space<smem>>
    %289 = vector.broadcast %288 : f32 to vector<16x16xf32>
    %290 = arith.mulf %289, %287 : vector<16x16xf32>
    %291 = arith.addf %285, %290 : vector<16x16xf32>
    %c0_155 = arith.constant 0 : index
    %c6_156 = arith.constant 6 : index
    %c4_157 = arith.constant 4 : index
    %292 = vector.load %arg5[%c0_155, %c6_156, %c4_157] : memref<2x22x22xf32, #tpu.memory_space<vmem>>, vector<1x16x16xf32>
    %293 = vector.shape_cast %292 : vector<1x16x16xf32> to vector<16x16xf32>
    %c46 = arith.constant 46 : index
    %294 = memref.load %arg2[%c46] : memref<98xf32, #tpu.memory_space<smem>>
    %295 = vector.broadcast %294 : f32 to vector<16x16xf32>
    %296 = arith.mulf %295, %293 : vector<16x16xf32>
    %297 = arith.addf %291, %296 : vector<16x16xf32>
    %c0_158 = arith.constant 0 : index
    %c6_159 = arith.constant 6 : index
    %c5_160 = arith.constant 5 : index
    %298 = vector.load %arg5[%c0_158, %c6_159, %c5_160] : memref<2x22x22xf32, #tpu.memory_space<vmem>>, vector<1x16x16xf32>
    %299 = vector.shape_cast %298 : vector<1x16x16xf32> to vector<16x16xf32>
    %c47 = arith.constant 47 : index
    %300 = memref.load %arg2[%c47] : memref<98xf32, #tpu.memory_space<smem>>
    %301 = vector.broadcast %300 : f32 to vector<16x16xf32>
    %302 = arith.mulf %301, %299 : vector<16x16xf32>
    %303 = arith.addf %297, %302 : vector<16x16xf32>
    %c0_161 = arith.constant 0 : index
    %c6_162 = arith.constant 6 : index
    %c6_163 = arith.constant 6 : index
    %304 = vector.load %arg5[%c0_161, %c6_162, %c6_163] : memref<2x22x22xf32, #tpu.memory_space<vmem>>, vector<1x16x16xf32>
    %305 = vector.shape_cast %304 : vector<1x16x16xf32> to vector<16x16xf32>
    %c48 = arith.constant 48 : index
    %306 = memref.load %arg2[%c48] : memref<98xf32, #tpu.memory_space<smem>>
    %307 = vector.broadcast %306 : f32 to vector<16x16xf32>
    %308 = arith.mulf %307, %305 : vector<16x16xf32>
    %309 = arith.addf %303, %308 : vector<16x16xf32>
    %c1_164 = arith.constant 1 : index
    %c0_165 = arith.constant 0 : index
    %c0_166 = arith.constant 0 : index
    %310 = vector.load %arg5[%c1_164, %c0_165, %c0_166] : memref<2x22x22xf32, #tpu.memory_space<vmem>>, vector<1x16x16xf32>
    %311 = vector.shape_cast %310 : vector<1x16x16xf32> to vector<16x16xf32>
    %c49 = arith.constant 49 : index
    %312 = memref.load %arg2[%c49] : memref<98xf32, #tpu.memory_space<smem>>
    %313 = vector.broadcast %312 : f32 to vector<16x16xf32>
    %314 = arith.mulf %313, %311 : vector<16x16xf32>
    %315 = arith.addf %309, %314 : vector<16x16xf32>
    %c1_167 = arith.constant 1 : index
    %c0_168 = arith.constant 0 : index
    %c1_169 = arith.constant 1 : index
    %316 = vector.load %arg5[%c1_167, %c0_168, %c1_169] : memref<2x22x22xf32, #tpu.memory_space<vmem>>, vector<1x16x16xf32>
    %317 = vector.shape_cast %316 : vector<1x16x16xf32> to vector<16x16xf32>
    %c50 = arith.constant 50 : index
    %318 = memref.load %arg2[%c50] : memref<98xf32, #tpu.memory_space<smem>>
    %319 = vector.broadcast %318 : f32 to vector<16x16xf32>
    %320 = arith.mulf %319, %317 : vector<16x16xf32>
    %321 = arith.addf %315, %320 : vector<16x16xf32>
    %c1_170 = arith.constant 1 : index
    %c0_171 = arith.constant 0 : index
    %c2_172 = arith.constant 2 : index
    %322 = vector.load %arg5[%c1_170, %c0_171, %c2_172] : memref<2x22x22xf32, #tpu.memory_space<vmem>>, vector<1x16x16xf32>
    %323 = vector.shape_cast %322 : vector<1x16x16xf32> to vector<16x16xf32>
    %c51 = arith.constant 51 : index
    %324 = memref.load %arg2[%c51] : memref<98xf32, #tpu.memory_space<smem>>
    %325 = vector.broadcast %324 : f32 to vector<16x16xf32>
    %326 = arith.mulf %325, %323 : vector<16x16xf32>
    %327 = arith.addf %321, %326 : vector<16x16xf32>
    %c1_173 = arith.constant 1 : index
    %c0_174 = arith.constant 0 : index
    %c3_175 = arith.constant 3 : index
    %328 = vector.load %arg5[%c1_173, %c0_174, %c3_175] : memref<2x22x22xf32, #tpu.memory_space<vmem>>, vector<1x16x16xf32>
    %329 = vector.shape_cast %328 : vector<1x16x16xf32> to vector<16x16xf32>
    %c52 = arith.constant 52 : index
    %330 = memref.load %arg2[%c52] : memref<98xf32, #tpu.memory_space<smem>>
    %331 = vector.broadcast %330 : f32 to vector<16x16xf32>
    %332 = arith.mulf %331, %329 : vector<16x16xf32>
    %333 = arith.addf %327, %332 : vector<16x16xf32>
    %c1_176 = arith.constant 1 : index
    %c0_177 = arith.constant 0 : index
    %c4_178 = arith.constant 4 : index
    %334 = vector.load %arg5[%c1_176, %c0_177, %c4_178] : memref<2x22x22xf32, #tpu.memory_space<vmem>>, vector<1x16x16xf32>
    %335 = vector.shape_cast %334 : vector<1x16x16xf32> to vector<16x16xf32>
    %c53 = arith.constant 53 : index
    %336 = memref.load %arg2[%c53] : memref<98xf32, #tpu.memory_space<smem>>
    %337 = vector.broadcast %336 : f32 to vector<16x16xf32>
    %338 = arith.mulf %337, %335 : vector<16x16xf32>
    %339 = arith.addf %333, %338 : vector<16x16xf32>
    %c1_179 = arith.constant 1 : index
    %c0_180 = arith.constant 0 : index
    %c5_181 = arith.constant 5 : index
    %340 = vector.load %arg5[%c1_179, %c0_180, %c5_181] : memref<2x22x22xf32, #tpu.memory_space<vmem>>, vector<1x16x16xf32>
    %341 = vector.shape_cast %340 : vector<1x16x16xf32> to vector<16x16xf32>
    %c54 = arith.constant 54 : index
    %342 = memref.load %arg2[%c54] : memref<98xf32, #tpu.memory_space<smem>>
    %343 = vector.broadcast %342 : f32 to vector<16x16xf32>
    %344 = arith.mulf %343, %341 : vector<16x16xf32>
    %345 = arith.addf %339, %344 : vector<16x16xf32>
    %c1_182 = arith.constant 1 : index
    %c0_183 = arith.constant 0 : index
    %c6_184 = arith.constant 6 : index
    %346 = vector.load %arg5[%c1_182, %c0_183, %c6_184] : memref<2x22x22xf32, #tpu.memory_space<vmem>>, vector<1x16x16xf32>
    %347 = vector.shape_cast %346 : vector<1x16x16xf32> to vector<16x16xf32>
    %c55 = arith.constant 55 : index
    %348 = memref.load %arg2[%c55] : memref<98xf32, #tpu.memory_space<smem>>
    %349 = vector.broadcast %348 : f32 to vector<16x16xf32>
    %350 = arith.mulf %349, %347 : vector<16x16xf32>
    %351 = arith.addf %345, %350 : vector<16x16xf32>
    %c1_185 = arith.constant 1 : index
    %c1_186 = arith.constant 1 : index
    %c0_187 = arith.constant 0 : index
    %352 = vector.load %arg5[%c1_185, %c1_186, %c0_187] : memref<2x22x22xf32, #tpu.memory_space<vmem>>, vector<1x16x16xf32>
    %353 = vector.shape_cast %352 : vector<1x16x16xf32> to vector<16x16xf32>
    %c56 = arith.constant 56 : index
    %354 = memref.load %arg2[%c56] : memref<98xf32, #tpu.memory_space<smem>>
    %355 = vector.broadcast %354 : f32 to vector<16x16xf32>
    %356 = arith.mulf %355, %353 : vector<16x16xf32>
    %357 = arith.addf %351, %356 : vector<16x16xf32>
    %c1_188 = arith.constant 1 : index
    %c1_189 = arith.constant 1 : index
    %c1_190 = arith.constant 1 : index
    %358 = vector.load %arg5[%c1_188, %c1_189, %c1_190] : memref<2x22x22xf32, #tpu.memory_space<vmem>>, vector<1x16x16xf32>
    %359 = vector.shape_cast %358 : vector<1x16x16xf32> to vector<16x16xf32>
    %c57 = arith.constant 57 : index
    %360 = memref.load %arg2[%c57] : memref<98xf32, #tpu.memory_space<smem>>
    %361 = vector.broadcast %360 : f32 to vector<16x16xf32>
    %362 = arith.mulf %361, %359 : vector<16x16xf32>
    %363 = arith.addf %357, %362 : vector<16x16xf32>
    %c1_191 = arith.constant 1 : index
    %c1_192 = arith.constant 1 : index
    %c2_193 = arith.constant 2 : index
    %364 = vector.load %arg5[%c1_191, %c1_192, %c2_193] : memref<2x22x22xf32, #tpu.memory_space<vmem>>, vector<1x16x16xf32>
    %365 = vector.shape_cast %364 : vector<1x16x16xf32> to vector<16x16xf32>
    %c58 = arith.constant 58 : index
    %366 = memref.load %arg2[%c58] : memref<98xf32, #tpu.memory_space<smem>>
    %367 = vector.broadcast %366 : f32 to vector<16x16xf32>
    %368 = arith.mulf %367, %365 : vector<16x16xf32>
    %369 = arith.addf %363, %368 : vector<16x16xf32>
    %c1_194 = arith.constant 1 : index
    %c1_195 = arith.constant 1 : index
    %c3_196 = arith.constant 3 : index
    %370 = vector.load %arg5[%c1_194, %c1_195, %c3_196] : memref<2x22x22xf32, #tpu.memory_space<vmem>>, vector<1x16x16xf32>
    %371 = vector.shape_cast %370 : vector<1x16x16xf32> to vector<16x16xf32>
    %c59 = arith.constant 59 : index
    %372 = memref.load %arg2[%c59] : memref<98xf32, #tpu.memory_space<smem>>
    %373 = vector.broadcast %372 : f32 to vector<16x16xf32>
    %374 = arith.mulf %373, %371 : vector<16x16xf32>
    %375 = arith.addf %369, %374 : vector<16x16xf32>
    %c1_197 = arith.constant 1 : index
    %c1_198 = arith.constant 1 : index
    %c4_199 = arith.constant 4 : index
    %376 = vector.load %arg5[%c1_197, %c1_198, %c4_199] : memref<2x22x22xf32, #tpu.memory_space<vmem>>, vector<1x16x16xf32>
    %377 = vector.shape_cast %376 : vector<1x16x16xf32> to vector<16x16xf32>
    %c60 = arith.constant 60 : index
    %378 = memref.load %arg2[%c60] : memref<98xf32, #tpu.memory_space<smem>>
    %379 = vector.broadcast %378 : f32 to vector<16x16xf32>
    %380 = arith.mulf %379, %377 : vector<16x16xf32>
    %381 = arith.addf %375, %380 : vector<16x16xf32>
    %c1_200 = arith.constant 1 : index
    %c1_201 = arith.constant 1 : index
    %c5_202 = arith.constant 5 : index
    %382 = vector.load %arg5[%c1_200, %c1_201, %c5_202] : memref<2x22x22xf32, #tpu.memory_space<vmem>>, vector<1x16x16xf32>
    %383 = vector.shape_cast %382 : vector<1x16x16xf32> to vector<16x16xf32>
    %c61 = arith.constant 61 : index
    %384 = memref.load %arg2[%c61] : memref<98xf32, #tpu.memory_space<smem>>
    %385 = vector.broadcast %384 : f32 to vector<16x16xf32>
    %386 = arith.mulf %385, %383 : vector<16x16xf32>
    %387 = arith.addf %381, %386 : vector<16x16xf32>
    %c1_203 = arith.constant 1 : index
    %c1_204 = arith.constant 1 : index
    %c6_205 = arith.constant 6 : index
    %388 = vector.load %arg5[%c1_203, %c1_204, %c6_205] : memref<2x22x22xf32, #tpu.memory_space<vmem>>, vector<1x16x16xf32>
    %389 = vector.shape_cast %388 : vector<1x16x16xf32> to vector<16x16xf32>
    %c62 = arith.constant 62 : index
    %390 = memref.load %arg2[%c62] : memref<98xf32, #tpu.memory_space<smem>>
    %391 = vector.broadcast %390 : f32 to vector<16x16xf32>
    %392 = arith.mulf %391, %389 : vector<16x16xf32>
    %393 = arith.addf %387, %392 : vector<16x16xf32>
    %c1_206 = arith.constant 1 : index
    %c2_207 = arith.constant 2 : index
    %c0_208 = arith.constant 0 : index
    %394 = vector.load %arg5[%c1_206, %c2_207, %c0_208] : memref<2x22x22xf32, #tpu.memory_space<vmem>>, vector<1x16x16xf32>
    %395 = vector.shape_cast %394 : vector<1x16x16xf32> to vector<16x16xf32>
    %c63 = arith.constant 63 : index
    %396 = memref.load %arg2[%c63] : memref<98xf32, #tpu.memory_space<smem>>
    %397 = vector.broadcast %396 : f32 to vector<16x16xf32>
    %398 = arith.mulf %397, %395 : vector<16x16xf32>
    %399 = arith.addf %393, %398 : vector<16x16xf32>
    %c1_209 = arith.constant 1 : index
    %c2_210 = arith.constant 2 : index
    %c1_211 = arith.constant 1 : index
    %400 = vector.load %arg5[%c1_209, %c2_210, %c1_211] : memref<2x22x22xf32, #tpu.memory_space<vmem>>, vector<1x16x16xf32>
    %401 = vector.shape_cast %400 : vector<1x16x16xf32> to vector<16x16xf32>
    %c64 = arith.constant 64 : index
    %402 = memref.load %arg2[%c64] : memref<98xf32, #tpu.memory_space<smem>>
    %403 = vector.broadcast %402 : f32 to vector<16x16xf32>
    %404 = arith.mulf %403, %401 : vector<16x16xf32>
    %405 = arith.addf %399, %404 : vector<16x16xf32>
    %c1_212 = arith.constant 1 : index
    %c2_213 = arith.constant 2 : index
    %c2_214 = arith.constant 2 : index
    %406 = vector.load %arg5[%c1_212, %c2_213, %c2_214] : memref<2x22x22xf32, #tpu.memory_space<vmem>>, vector<1x16x16xf32>
    %407 = vector.shape_cast %406 : vector<1x16x16xf32> to vector<16x16xf32>
    %c65 = arith.constant 65 : index
    %408 = memref.load %arg2[%c65] : memref<98xf32, #tpu.memory_space<smem>>
    %409 = vector.broadcast %408 : f32 to vector<16x16xf32>
    %410 = arith.mulf %409, %407 : vector<16x16xf32>
    %411 = arith.addf %405, %410 : vector<16x16xf32>
    %c1_215 = arith.constant 1 : index
    %c2_216 = arith.constant 2 : index
    %c3_217 = arith.constant 3 : index
    %412 = vector.load %arg5[%c1_215, %c2_216, %c3_217] : memref<2x22x22xf32, #tpu.memory_space<vmem>>, vector<1x16x16xf32>
    %413 = vector.shape_cast %412 : vector<1x16x16xf32> to vector<16x16xf32>
    %c66 = arith.constant 66 : index
    %414 = memref.load %arg2[%c66] : memref<98xf32, #tpu.memory_space<smem>>
    %415 = vector.broadcast %414 : f32 to vector<16x16xf32>
    %416 = arith.mulf %415, %413 : vector<16x16xf32>
    %417 = arith.addf %411, %416 : vector<16x16xf32>
    %c1_218 = arith.constant 1 : index
    %c2_219 = arith.constant 2 : index
    %c4_220 = arith.constant 4 : index
    %418 = vector.load %arg5[%c1_218, %c2_219, %c4_220] : memref<2x22x22xf32, #tpu.memory_space<vmem>>, vector<1x16x16xf32>
    %419 = vector.shape_cast %418 : vector<1x16x16xf32> to vector<16x16xf32>
    %c67 = arith.constant 67 : index
    %420 = memref.load %arg2[%c67] : memref<98xf32, #tpu.memory_space<smem>>
    %421 = vector.broadcast %420 : f32 to vector<16x16xf32>
    %422 = arith.mulf %421, %419 : vector<16x16xf32>
    %423 = arith.addf %417, %422 : vector<16x16xf32>
    %c1_221 = arith.constant 1 : index
    %c2_222 = arith.constant 2 : index
    %c5_223 = arith.constant 5 : index
    %424 = vector.load %arg5[%c1_221, %c2_222, %c5_223] : memref<2x22x22xf32, #tpu.memory_space<vmem>>, vector<1x16x16xf32>
    %425 = vector.shape_cast %424 : vector<1x16x16xf32> to vector<16x16xf32>
    %c68 = arith.constant 68 : index
    %426 = memref.load %arg2[%c68] : memref<98xf32, #tpu.memory_space<smem>>
    %427 = vector.broadcast %426 : f32 to vector<16x16xf32>
    %428 = arith.mulf %427, %425 : vector<16x16xf32>
    %429 = arith.addf %423, %428 : vector<16x16xf32>
    %c1_224 = arith.constant 1 : index
    %c2_225 = arith.constant 2 : index
    %c6_226 = arith.constant 6 : index
    %430 = vector.load %arg5[%c1_224, %c2_225, %c6_226] : memref<2x22x22xf32, #tpu.memory_space<vmem>>, vector<1x16x16xf32>
    %431 = vector.shape_cast %430 : vector<1x16x16xf32> to vector<16x16xf32>
    %c69 = arith.constant 69 : index
    %432 = memref.load %arg2[%c69] : memref<98xf32, #tpu.memory_space<smem>>
    %433 = vector.broadcast %432 : f32 to vector<16x16xf32>
    %434 = arith.mulf %433, %431 : vector<16x16xf32>
    %435 = arith.addf %429, %434 : vector<16x16xf32>
    %c1_227 = arith.constant 1 : index
    %c3_228 = arith.constant 3 : index
    %c0_229 = arith.constant 0 : index
    %436 = vector.load %arg5[%c1_227, %c3_228, %c0_229] : memref<2x22x22xf32, #tpu.memory_space<vmem>>, vector<1x16x16xf32>
    %437 = vector.shape_cast %436 : vector<1x16x16xf32> to vector<16x16xf32>
    %c70 = arith.constant 70 : index
    %438 = memref.load %arg2[%c70] : memref<98xf32, #tpu.memory_space<smem>>
    %439 = vector.broadcast %438 : f32 to vector<16x16xf32>
    %440 = arith.mulf %439, %437 : vector<16x16xf32>
    %441 = arith.addf %435, %440 : vector<16x16xf32>
    %c1_230 = arith.constant 1 : index
    %c3_231 = arith.constant 3 : index
    %c1_232 = arith.constant 1 : index
    %442 = vector.load %arg5[%c1_230, %c3_231, %c1_232] : memref<2x22x22xf32, #tpu.memory_space<vmem>>, vector<1x16x16xf32>
    %443 = vector.shape_cast %442 : vector<1x16x16xf32> to vector<16x16xf32>
    %c71 = arith.constant 71 : index
    %444 = memref.load %arg2[%c71] : memref<98xf32, #tpu.memory_space<smem>>
    %445 = vector.broadcast %444 : f32 to vector<16x16xf32>
    %446 = arith.mulf %445, %443 : vector<16x16xf32>
    %447 = arith.addf %441, %446 : vector<16x16xf32>
    %c1_233 = arith.constant 1 : index
    %c3_234 = arith.constant 3 : index
    %c2_235 = arith.constant 2 : index
    %448 = vector.load %arg5[%c1_233, %c3_234, %c2_235] : memref<2x22x22xf32, #tpu.memory_space<vmem>>, vector<1x16x16xf32>
    %449 = vector.shape_cast %448 : vector<1x16x16xf32> to vector<16x16xf32>
    %c72 = arith.constant 72 : index
    %450 = memref.load %arg2[%c72] : memref<98xf32, #tpu.memory_space<smem>>
    %451 = vector.broadcast %450 : f32 to vector<16x16xf32>
    %452 = arith.mulf %451, %449 : vector<16x16xf32>
    %453 = arith.addf %447, %452 : vector<16x16xf32>
    %c1_236 = arith.constant 1 : index
    %c3_237 = arith.constant 3 : index
    %c3_238 = arith.constant 3 : index
    %454 = vector.load %arg5[%c1_236, %c3_237, %c3_238] : memref<2x22x22xf32, #tpu.memory_space<vmem>>, vector<1x16x16xf32>
    %455 = vector.shape_cast %454 : vector<1x16x16xf32> to vector<16x16xf32>
    %c73 = arith.constant 73 : index
    %456 = memref.load %arg2[%c73] : memref<98xf32, #tpu.memory_space<smem>>
    %457 = vector.broadcast %456 : f32 to vector<16x16xf32>
    %458 = arith.mulf %457, %455 : vector<16x16xf32>
    %459 = arith.addf %453, %458 : vector<16x16xf32>
    %c1_239 = arith.constant 1 : index
    %c3_240 = arith.constant 3 : index
    %c4_241 = arith.constant 4 : index
    %460 = vector.load %arg5[%c1_239, %c3_240, %c4_241] : memref<2x22x22xf32, #tpu.memory_space<vmem>>, vector<1x16x16xf32>
    %461 = vector.shape_cast %460 : vector<1x16x16xf32> to vector<16x16xf32>
    %c74 = arith.constant 74 : index
    %462 = memref.load %arg2[%c74] : memref<98xf32, #tpu.memory_space<smem>>
    %463 = vector.broadcast %462 : f32 to vector<16x16xf32>
    %464 = arith.mulf %463, %461 : vector<16x16xf32>
    %465 = arith.addf %459, %464 : vector<16x16xf32>
    %c1_242 = arith.constant 1 : index
    %c3_243 = arith.constant 3 : index
    %c5_244 = arith.constant 5 : index
    %466 = vector.load %arg5[%c1_242, %c3_243, %c5_244] : memref<2x22x22xf32, #tpu.memory_space<vmem>>, vector<1x16x16xf32>
    %467 = vector.shape_cast %466 : vector<1x16x16xf32> to vector<16x16xf32>
    %c75 = arith.constant 75 : index
    %468 = memref.load %arg2[%c75] : memref<98xf32, #tpu.memory_space<smem>>
    %469 = vector.broadcast %468 : f32 to vector<16x16xf32>
    %470 = arith.mulf %469, %467 : vector<16x16xf32>
    %471 = arith.addf %465, %470 : vector<16x16xf32>
    %c1_245 = arith.constant 1 : index
    %c3_246 = arith.constant 3 : index
    %c6_247 = arith.constant 6 : index
    %472 = vector.load %arg5[%c1_245, %c3_246, %c6_247] : memref<2x22x22xf32, #tpu.memory_space<vmem>>, vector<1x16x16xf32>
    %473 = vector.shape_cast %472 : vector<1x16x16xf32> to vector<16x16xf32>
    %c76 = arith.constant 76 : index
    %474 = memref.load %arg2[%c76] : memref<98xf32, #tpu.memory_space<smem>>
    %475 = vector.broadcast %474 : f32 to vector<16x16xf32>
    %476 = arith.mulf %475, %473 : vector<16x16xf32>
    %477 = arith.addf %471, %476 : vector<16x16xf32>
    %c1_248 = arith.constant 1 : index
    %c4_249 = arith.constant 4 : index
    %c0_250 = arith.constant 0 : index
    %478 = vector.load %arg5[%c1_248, %c4_249, %c0_250] : memref<2x22x22xf32, #tpu.memory_space<vmem>>, vector<1x16x16xf32>
    %479 = vector.shape_cast %478 : vector<1x16x16xf32> to vector<16x16xf32>
    %c77 = arith.constant 77 : index
    %480 = memref.load %arg2[%c77] : memref<98xf32, #tpu.memory_space<smem>>
    %481 = vector.broadcast %480 : f32 to vector<16x16xf32>
    %482 = arith.mulf %481, %479 : vector<16x16xf32>
    %483 = arith.addf %477, %482 : vector<16x16xf32>
    %c1_251 = arith.constant 1 : index
    %c4_252 = arith.constant 4 : index
    %c1_253 = arith.constant 1 : index
    %484 = vector.load %arg5[%c1_251, %c4_252, %c1_253] : memref<2x22x22xf32, #tpu.memory_space<vmem>>, vector<1x16x16xf32>
    %485 = vector.shape_cast %484 : vector<1x16x16xf32> to vector<16x16xf32>
    %c78 = arith.constant 78 : index
    %486 = memref.load %arg2[%c78] : memref<98xf32, #tpu.memory_space<smem>>
    %487 = vector.broadcast %486 : f32 to vector<16x16xf32>
    %488 = arith.mulf %487, %485 : vector<16x16xf32>
    %489 = arith.addf %483, %488 : vector<16x16xf32>
    %c1_254 = arith.constant 1 : index
    %c4_255 = arith.constant 4 : index
    %c2_256 = arith.constant 2 : index
    %490 = vector.load %arg5[%c1_254, %c4_255, %c2_256] : memref<2x22x22xf32, #tpu.memory_space<vmem>>, vector<1x16x16xf32>
    %491 = vector.shape_cast %490 : vector<1x16x16xf32> to vector<16x16xf32>
    %c79 = arith.constant 79 : index
    %492 = memref.load %arg2[%c79] : memref<98xf32, #tpu.memory_space<smem>>
    %493 = vector.broadcast %492 : f32 to vector<16x16xf32>
    %494 = arith.mulf %493, %491 : vector<16x16xf32>
    %495 = arith.addf %489, %494 : vector<16x16xf32>
    %c1_257 = arith.constant 1 : index
    %c4_258 = arith.constant 4 : index
    %c3_259 = arith.constant 3 : index
    %496 = vector.load %arg5[%c1_257, %c4_258, %c3_259] : memref<2x22x22xf32, #tpu.memory_space<vmem>>, vector<1x16x16xf32>
    %497 = vector.shape_cast %496 : vector<1x16x16xf32> to vector<16x16xf32>
    %c80 = arith.constant 80 : index
    %498 = memref.load %arg2[%c80] : memref<98xf32, #tpu.memory_space<smem>>
    %499 = vector.broadcast %498 : f32 to vector<16x16xf32>
    %500 = arith.mulf %499, %497 : vector<16x16xf32>
    %501 = arith.addf %495, %500 : vector<16x16xf32>
    %c1_260 = arith.constant 1 : index
    %c4_261 = arith.constant 4 : index
    %c4_262 = arith.constant 4 : index
    %502 = vector.load %arg5[%c1_260, %c4_261, %c4_262] : memref<2x22x22xf32, #tpu.memory_space<vmem>>, vector<1x16x16xf32>
    %503 = vector.shape_cast %502 : vector<1x16x16xf32> to vector<16x16xf32>
    %c81 = arith.constant 81 : index
    %504 = memref.load %arg2[%c81] : memref<98xf32, #tpu.memory_space<smem>>
    %505 = vector.broadcast %504 : f32 to vector<16x16xf32>
    %506 = arith.mulf %505, %503 : vector<16x16xf32>
    %507 = arith.addf %501, %506 : vector<16x16xf32>
    %c1_263 = arith.constant 1 : index
    %c4_264 = arith.constant 4 : index
    %c5_265 = arith.constant 5 : index
    %508 = vector.load %arg5[%c1_263, %c4_264, %c5_265] : memref<2x22x22xf32, #tpu.memory_space<vmem>>, vector<1x16x16xf32>
    %509 = vector.shape_cast %508 : vector<1x16x16xf32> to vector<16x16xf32>
    %c82 = arith.constant 82 : index
    %510 = memref.load %arg2[%c82] : memref<98xf32, #tpu.memory_space<smem>>
    %511 = vector.broadcast %510 : f32 to vector<16x16xf32>
    %512 = arith.mulf %511, %509 : vector<16x16xf32>
    %513 = arith.addf %507, %512 : vector<16x16xf32>
    %c1_266 = arith.constant 1 : index
    %c4_267 = arith.constant 4 : index
    %c6_268 = arith.constant 6 : index
    %514 = vector.load %arg5[%c1_266, %c4_267, %c6_268] : memref<2x22x22xf32, #tpu.memory_space<vmem>>, vector<1x16x16xf32>
    %515 = vector.shape_cast %514 : vector<1x16x16xf32> to vector<16x16xf32>
    %c83 = arith.constant 83 : index
    %516 = memref.load %arg2[%c83] : memref<98xf32, #tpu.memory_space<smem>>
    %517 = vector.broadcast %516 : f32 to vector<16x16xf32>
    %518 = arith.mulf %517, %515 : vector<16x16xf32>
    %519 = arith.addf %513, %518 : vector<16x16xf32>
    %c1_269 = arith.constant 1 : index
    %c5_270 = arith.constant 5 : index
    %c0_271 = arith.constant 0 : index
    %520 = vector.load %arg5[%c1_269, %c5_270, %c0_271] : memref<2x22x22xf32, #tpu.memory_space<vmem>>, vector<1x16x16xf32>
    %521 = vector.shape_cast %520 : vector<1x16x16xf32> to vector<16x16xf32>
    %c84 = arith.constant 84 : index
    %522 = memref.load %arg2[%c84] : memref<98xf32, #tpu.memory_space<smem>>
    %523 = vector.broadcast %522 : f32 to vector<16x16xf32>
    %524 = arith.mulf %523, %521 : vector<16x16xf32>
    %525 = arith.addf %519, %524 : vector<16x16xf32>
    %c1_272 = arith.constant 1 : index
    %c5_273 = arith.constant 5 : index
    %c1_274 = arith.constant 1 : index
    %526 = vector.load %arg5[%c1_272, %c5_273, %c1_274] : memref<2x22x22xf32, #tpu.memory_space<vmem>>, vector<1x16x16xf32>
    %527 = vector.shape_cast %526 : vector<1x16x16xf32> to vector<16x16xf32>
    %c85 = arith.constant 85 : index
    %528 = memref.load %arg2[%c85] : memref<98xf32, #tpu.memory_space<smem>>
    %529 = vector.broadcast %528 : f32 to vector<16x16xf32>
    %530 = arith.mulf %529, %527 : vector<16x16xf32>
    %531 = arith.addf %525, %530 : vector<16x16xf32>
    %c1_275 = arith.constant 1 : index
    %c5_276 = arith.constant 5 : index
    %c2_277 = arith.constant 2 : index
    %532 = vector.load %arg5[%c1_275, %c5_276, %c2_277] : memref<2x22x22xf32, #tpu.memory_space<vmem>>, vector<1x16x16xf32>
    %533 = vector.shape_cast %532 : vector<1x16x16xf32> to vector<16x16xf32>
    %c86 = arith.constant 86 : index
    %534 = memref.load %arg2[%c86] : memref<98xf32, #tpu.memory_space<smem>>
    %535 = vector.broadcast %534 : f32 to vector<16x16xf32>
    %536 = arith.mulf %535, %533 : vector<16x16xf32>
    %537 = arith.addf %531, %536 : vector<16x16xf32>
    %c1_278 = arith.constant 1 : index
    %c5_279 = arith.constant 5 : index
    %c3_280 = arith.constant 3 : index
    %538 = vector.load %arg5[%c1_278, %c5_279, %c3_280] : memref<2x22x22xf32, #tpu.memory_space<vmem>>, vector<1x16x16xf32>
    %539 = vector.shape_cast %538 : vector<1x16x16xf32> to vector<16x16xf32>
    %c87 = arith.constant 87 : index
    %540 = memref.load %arg2[%c87] : memref<98xf32, #tpu.memory_space<smem>>
    %541 = vector.broadcast %540 : f32 to vector<16x16xf32>
    %542 = arith.mulf %541, %539 : vector<16x16xf32>
    %543 = arith.addf %537, %542 : vector<16x16xf32>
    %c1_281 = arith.constant 1 : index
    %c5_282 = arith.constant 5 : index
    %c4_283 = arith.constant 4 : index
    %544 = vector.load %arg5[%c1_281, %c5_282, %c4_283] : memref<2x22x22xf32, #tpu.memory_space<vmem>>, vector<1x16x16xf32>
    %545 = vector.shape_cast %544 : vector<1x16x16xf32> to vector<16x16xf32>
    %c88 = arith.constant 88 : index
    %546 = memref.load %arg2[%c88] : memref<98xf32, #tpu.memory_space<smem>>
    %547 = vector.broadcast %546 : f32 to vector<16x16xf32>
    %548 = arith.mulf %547, %545 : vector<16x16xf32>
    %549 = arith.addf %543, %548 : vector<16x16xf32>
    %c1_284 = arith.constant 1 : index
    %c5_285 = arith.constant 5 : index
    %c5_286 = arith.constant 5 : index
    %550 = vector.load %arg5[%c1_284, %c5_285, %c5_286] : memref<2x22x22xf32, #tpu.memory_space<vmem>>, vector<1x16x16xf32>
    %551 = vector.shape_cast %550 : vector<1x16x16xf32> to vector<16x16xf32>
    %c89 = arith.constant 89 : index
    %552 = memref.load %arg2[%c89] : memref<98xf32, #tpu.memory_space<smem>>
    %553 = vector.broadcast %552 : f32 to vector<16x16xf32>
    %554 = arith.mulf %553, %551 : vector<16x16xf32>
    %555 = arith.addf %549, %554 : vector<16x16xf32>
    %c1_287 = arith.constant 1 : index
    %c5_288 = arith.constant 5 : index
    %c6_289 = arith.constant 6 : index
    %556 = vector.load %arg5[%c1_287, %c5_288, %c6_289] : memref<2x22x22xf32, #tpu.memory_space<vmem>>, vector<1x16x16xf32>
    %557 = vector.shape_cast %556 : vector<1x16x16xf32> to vector<16x16xf32>
    %c90 = arith.constant 90 : index
    %558 = memref.load %arg2[%c90] : memref<98xf32, #tpu.memory_space<smem>>
    %559 = vector.broadcast %558 : f32 to vector<16x16xf32>
    %560 = arith.mulf %559, %557 : vector<16x16xf32>
    %561 = arith.addf %555, %560 : vector<16x16xf32>
    %c1_290 = arith.constant 1 : index
    %c6_291 = arith.constant 6 : index
    %c0_292 = arith.constant 0 : index
    %562 = vector.load %arg5[%c1_290, %c6_291, %c0_292] : memref<2x22x22xf32, #tpu.memory_space<vmem>>, vector<1x16x16xf32>
    %563 = vector.shape_cast %562 : vector<1x16x16xf32> to vector<16x16xf32>
    %c91 = arith.constant 91 : index
    %564 = memref.load %arg2[%c91] : memref<98xf32, #tpu.memory_space<smem>>
    %565 = vector.broadcast %564 : f32 to vector<16x16xf32>
    %566 = arith.mulf %565, %563 : vector<16x16xf32>
    %567 = arith.addf %561, %566 : vector<16x16xf32>
    %c1_293 = arith.constant 1 : index
    %c6_294 = arith.constant 6 : index
    %c1_295 = arith.constant 1 : index
    %568 = vector.load %arg5[%c1_293, %c6_294, %c1_295] : memref<2x22x22xf32, #tpu.memory_space<vmem>>, vector<1x16x16xf32>
    %569 = vector.shape_cast %568 : vector<1x16x16xf32> to vector<16x16xf32>
    %c92 = arith.constant 92 : index
    %570 = memref.load %arg2[%c92] : memref<98xf32, #tpu.memory_space<smem>>
    %571 = vector.broadcast %570 : f32 to vector<16x16xf32>
    %572 = arith.mulf %571, %569 : vector<16x16xf32>
    %573 = arith.addf %567, %572 : vector<16x16xf32>
    %c1_296 = arith.constant 1 : index
    %c6_297 = arith.constant 6 : index
    %c2_298 = arith.constant 2 : index
    %574 = vector.load %arg5[%c1_296, %c6_297, %c2_298] : memref<2x22x22xf32, #tpu.memory_space<vmem>>, vector<1x16x16xf32>
    %575 = vector.shape_cast %574 : vector<1x16x16xf32> to vector<16x16xf32>
    %c93 = arith.constant 93 : index
    %576 = memref.load %arg2[%c93] : memref<98xf32, #tpu.memory_space<smem>>
    %577 = vector.broadcast %576 : f32 to vector<16x16xf32>
    %578 = arith.mulf %577, %575 : vector<16x16xf32>
    %579 = arith.addf %573, %578 : vector<16x16xf32>
    %c1_299 = arith.constant 1 : index
    %c6_300 = arith.constant 6 : index
    %c3_301 = arith.constant 3 : index
    %580 = vector.load %arg5[%c1_299, %c6_300, %c3_301] : memref<2x22x22xf32, #tpu.memory_space<vmem>>, vector<1x16x16xf32>
    %581 = vector.shape_cast %580 : vector<1x16x16xf32> to vector<16x16xf32>
    %c94 = arith.constant 94 : index
    %582 = memref.load %arg2[%c94] : memref<98xf32, #tpu.memory_space<smem>>
    %583 = vector.broadcast %582 : f32 to vector<16x16xf32>
    %584 = arith.mulf %583, %581 : vector<16x16xf32>
    %585 = arith.addf %579, %584 : vector<16x16xf32>
    %c1_302 = arith.constant 1 : index
    %c6_303 = arith.constant 6 : index
    %c4_304 = arith.constant 4 : index
    %586 = vector.load %arg5[%c1_302, %c6_303, %c4_304] : memref<2x22x22xf32, #tpu.memory_space<vmem>>, vector<1x16x16xf32>
    %587 = vector.shape_cast %586 : vector<1x16x16xf32> to vector<16x16xf32>
    %c95 = arith.constant 95 : index
    %588 = memref.load %arg2[%c95] : memref<98xf32, #tpu.memory_space<smem>>
    %589 = vector.broadcast %588 : f32 to vector<16x16xf32>
    %590 = arith.mulf %589, %587 : vector<16x16xf32>
    %591 = arith.addf %585, %590 : vector<16x16xf32>
    %c1_305 = arith.constant 1 : index
    %c6_306 = arith.constant 6 : index
    %c5_307 = arith.constant 5 : index
    %592 = vector.load %arg5[%c1_305, %c6_306, %c5_307] : memref<2x22x22xf32, #tpu.memory_space<vmem>>, vector<1x16x16xf32>
    %593 = vector.shape_cast %592 : vector<1x16x16xf32> to vector<16x16xf32>
    %c96 = arith.constant 96 : index
    %594 = memref.load %arg2[%c96] : memref<98xf32, #tpu.memory_space<smem>>
    %595 = vector.broadcast %594 : f32 to vector<16x16xf32>
    %596 = arith.mulf %595, %593 : vector<16x16xf32>
    %597 = arith.addf %591, %596 : vector<16x16xf32>
    %c1_308 = arith.constant 1 : index
    %c6_309 = arith.constant 6 : index
    %c6_310 = arith.constant 6 : index
    %598 = vector.load %arg5[%c1_308, %c6_309, %c6_310] : memref<2x22x22xf32, #tpu.memory_space<vmem>>, vector<1x16x16xf32>
    %599 = vector.shape_cast %598 : vector<1x16x16xf32> to vector<16x16xf32>
    %c97 = arith.constant 97 : index
    %600 = memref.load %arg2[%c97] : memref<98xf32, #tpu.memory_space<smem>>
    %601 = vector.broadcast %600 : f32 to vector<16x16xf32>
    %602 = arith.mulf %601, %599 : vector<16x16xf32>
    %603 = arith.addf %597, %602 : vector<16x16xf32>
    %cst_311 = arith.constant 0.000000e+00 : f32
    %604 = vector.broadcast %cst_311 : f32 to vector<16x16xf32>
    %605 = arith.subf %604, %603 : vector<16x16xf32>
    %606 = math.exp %605 : vector<16x16xf32>
    %cst_312 = arith.constant 1.000000e+00 : f32
    %607 = vector.broadcast %cst_312 : f32 to vector<16x16xf32>
    %608 = arith.addf %607, %606 : vector<16x16xf32>
    %cst_313 = arith.constant 1.000000e+00 : f32
    %609 = vector.broadcast %cst_313 : f32 to vector<16x16xf32>
    %610 = arith.divf %609, %608 : vector<16x16xf32>
    %611 = vector.shape_cast %610 : vector<16x16xf32> to vector<1x16x16xf32>
    %612 = vector.broadcast %611 : vector<1x16x16xf32> to vector<4x16x16xf32>
    %613 = arith.mulf %1, %612 : vector<4x16x16xf32>
    %c0_314 = arith.constant 0 : index
    %c0_315 = arith.constant 0 : index
    %c0_316 = arith.constant 0 : index
    %c0_317 = arith.constant 0 : index
    %614 = vector.load %arg4[%c0_314, %c0_315, %c0_316, %c0_317] : memref<1x4x16x16xf32, #tpu.memory_space<vmem>>, vector<1x4x16x16xf32>
    %615 = vector.shape_cast %614 : vector<1x4x16x16xf32> to vector<4x16x16xf32>
    %616 = vector.shape_cast %613 : vector<4x16x16xf32> to vector<1x4x16x16xf32>
    tpu.vector_store %arg4[%c0_314, %c0_315, %c0_316, %c0_317], %616 {strides = array<i32>} : memref<1x4x16x16xf32, #tpu.memory_space<vmem>>, vector<1x4x16x16xf32>,
    return
  }
  func.func @transform_0(%arg0: i32) -> (i32, i32, i32, i32) {
    %c0_i32 = arith.constant 0 : i32
    %c0_i32_0 = arith.constant 0 : i32
    %c0_i32_1 = arith.constant 0 : i32
    %c0_i32_2 = arith.constant 0 : i32
    return %arg0, %c0_i32, %c0_i32_0, %c0_i32_1 : i32, i32, i32, i32
  }
  func.func @transform_1(%arg0: i32) -> i32 {
    %c0_i32 = arith.constant 0 : i32
    %c0_i32_0 = arith.constant 0 : i32
    return %c0_i32 : i32
  }
  func.func @transform_2(%arg0: i32) -> i32 {
    %c0_i32 = arith.constant 0 : i32
    %c0_i32_0 = arith.constant 0 : i32
    return %c0_i32 : i32
  }
  func.func @transform_3(%arg0: i32) -> (i32, i32, i32, i32) {
    %c0_i32 = arith.constant 0 : i32
    %c0_i32_0 = arith.constant 0 : i32
    %c0_i32_1 = arith.constant 0 : i32
    %c0_i32_2 = arith.constant 0 : i32
    return %arg0, %c0_i32, %c0_i32_0, %c0_i32_1 : i32, i32, i32, i32
  }
}

</mosaic_0001>

<llo_original>
// kernel: tpu_custom_call.1
$region0: #{tpu_custom_call.1}
  #allocation0 [shape = 'u32[]', space=smem, size = 0x4, offset = 0x4, fixed_abs, tag = 'smem constant byte address 0x4 - core index']
  #allocation1 [shape = 'u32[72,128]{1,0:T(1,128)}', space=vmem, size = 0x9000, scoped, tag = 'internal scratch']
  #allocation2 [shape = 'f32[2,22,22]{2,1,0:T(8,128)}', space=vmem, size = 0x6000, scoped, tag = 'scratch operand']
  #allocation3 [shape = 'f32[1]{0:T(128)S(6)}', space=smem, size = 0x200, scoped, tag = 'scoped memory for tpu_custom_call.1']
  %s0 = inlined_call_operand.hbm [shape: f32[2,4,16,16], index: 0, kind: input, shape index: {}]
  %s1 = inlined_call_operand.vmem [shape: f32[98], index: 1, kind: input, shape index: {}]
  %s2 = inlined_call_operand.<no memory space> [shape: f32[1], index: 2, kind: input, shape index: {}]
  %s3 = inlined_call_operand.hbm [shape: f32[2,4,16,16], index: 3, kind: output, shape index: {}]
  %s4 = sld [smem:[#allocation0]]
  $region53: #{tpu_custom_call.1} parent=0
    _
  %s6 = ssub.s32 1, %s4
  %s7 = scalar_select 0, %s6, %s4
  %8 = sst [smem:[#allocation3]] %s2
  $region1: #{tpu_custom_call.1} parent=0
    #allocation4 [shape = 'u8[65536]{0}', space=vmem, size = 0x10000, scoped, tag = 'input window, operand 0']
    #allocation5 [shape = 's32[2]{0}', space=sflag, size = 0x8, scoped, tag = 'scoped memory for tpu_custom_call.1']
    #allocation6 [shape = 's32[2]{0}', space=sflag, size = 0x8, scoped, tag = 'scoped memory for tpu_custom_call.1']
    #allocation7 [shape = 's32[2]{0}', space=sflag, size = 0x8, scoped, tag = 'scoped memory for tpu_custom_call.1']
    #allocation8 [shape = 'u8[512]{0}', space=smem, size = 0x200, scoped, tag = 'input window, operand 1, single buffered']
    #allocation9 [shape = 'u8[65536]{0}', space=vmem, size = 0x10000, scoped, tag = 'output window, operand 0']
    %9 = vsyncpa [#allocation5], 0
    %s10 = scalar_lea.sflag [#allocation5], 1
    %11 = vsyncpa %s10, 0
    %12 = vsyncpa [#allocation7], 0
    %13 = vsyncpa [#allocation6], 0
    %s14 = scalar_lea.sflag [#allocation6], 1
    %15 = vsyncpa %s14, 0
    loop: start=0, step=1, limit=4
    $region2: #{tpu_custom_call.1} parent=1 // loop_pre_header
      _
    $region3: #{tpu_custom_call.1} parent=1 // loop_header
      %s17 = sphi 0, %s21
      %p18 = scmp.ge.s32.totalorder %s17, 4
      %s27 = sphi 0, %s29
      %s30 = sphi 0, %s27
      %s31 = sphi 0, %s30
      %s47 = sphi 0, %s31
      %s51 = sphi 0, %s51
      %s53 = sphi 0, %s51
      %s54 = sphi 0, %s53
      %s68 = sphi 0, %s54
      %s72 = sphi 0, %s72
      %s74 = sphi 0, %s72
      %s75 = sphi 0, %s74
      %s89 = sphi 0, %s75
      %s95 = sphi 0, %s97
      %s98 = sphi 0, %s95
      %s99 = sphi 0, %s98
      %s115 = sphi 0, %s99
    $region4: #{tpu_custom_call.1} parent=1 // loop_header_branch
      %20 = sbr.rel (%p18) target = $region8
    $region5: #{tpu_custom_call.1} parent=1 // loop_body
      %s22 = ssub.s32 %s17, 1
      %s23 = ssub.s32 %s17, 2
      %s24 = sadd.s32 %s17, 1
      %s25 = ssub.s32 %s17, %s24
      %p26 = scmp.eq.s32.totalorder %s25, 0
      %s28 = sadd.s32 %s27, 1
      %s29 = scalar_select %p26, %s27, %s28
      %p32 = pneg %p26
      %p33 = scmp.eq.s32.totalorder %s17, 1
      %p34 = por %p32, %p33
      %p35 = scmp.ne.s32.totalorder %s27, %s30
      %p36 = scmp.eq.s32.totalorder %s17, 0
      %p37 = por %p35, %p36
      %p38 = scmp.ne.s32.totalorder %s27, %s30
      %p39 = scmp.eq.s32.totalorder %s22, 1
      %p40 = por %p38, %p39
      %p41 = scmp.ne.s32.totalorder %s30, %s31
      %p42 = scmp.eq.s32.totalorder %s22, 0
      %p43 = por %p41, %p42
      %p44 = scmp.ne.s32.totalorder %s30, %s31
      %p45 = scmp.eq.s32.totalorder %s23, 1
      %p46 = por %p44, %p45
      %p48 = scmp.ne.s32.totalorder %s31, %s47
      %p49 = scmp.eq.s32.totalorder %s23, 0
      %p50 = por %p48, %p49
      %s52 = sadd.s32 %s51, 1
      %p55 = scmp.eq.s32.totalorder %s17, 1
      %p56 = scmp.ne.s32.totalorder %s51, %s53
      %p57 = scmp.eq.s32.totalorder %s17, 0
      %p58 = por %p56, %p57
      %p59 = scmp.ne.s32.totalorder %s51, %s53
      %p60 = scmp.eq.s32.totalorder %s22, 1
      %p61 = por %p59, %p60
      %p62 = scmp.ne.s32.totalorder %s53, %s54
      %p63 = scmp.eq.s32.totalorder %s22, 0
      %p64 = por %p62, %p63
      %p65 = scmp.ne.s32.totalorder %s53, %s54
      %p66 = scmp.eq.s32.totalorder %s23, 1
      %p67 = por %p65, %p66
      %p69 = scmp.ne.s32.totalorder %s54, %s68
      %p70 = scmp.eq.s32.totalorder %s23, 0
      %p71 = por %p69, %p70
      %s73 = sadd.s32 %s72, 1
      %p76 = scmp.eq.s32.totalorder %s17, 1
      %p77 = scmp.ne.s32.totalorder %s72, %s74
      %p78 = scmp.eq.s32.totalorder %s17, 0
      %p79 = por %p77, %p78
      %p80 = scmp.ne.s32.totalorder %s72, %s74
      %p81 = scmp.eq.s32.totalorder %s22, 1
      %p82 = por %p80, %p81
      %p83 = scmp.ne.s32.totalorder %s74, %s75
      %p84 = scmp.eq.s32.totalorder %s22, 0
      %p85 = por %p83, %p84
      %p86 = scmp.ne.s32.totalorder %s74, %s75
      %p87 = scmp.eq.s32.totalorder %s23, 1
      %p88 = por %p86, %p87
      %p90 = scmp.ne.s32.totalorder %s75, %s89
      %p91 = scmp.eq.s32.totalorder %s23, 0
      %p92 = por %p90, %p91
      %s93 = ssub.s32 %s17, %s24
      %p94 = scmp.eq.s32.totalorder %s93, 0
      %s96 = sadd.s32 %s95, 1
      %s97 = scalar_select %p94, %s95, %s96
      %p100 = pneg %p94
      %p101 = scmp.eq.s32.totalorder %s17, 1
      %p102 = por %p100, %p101
      %p103 = scmp.ne.s32.totalorder %s95, %s98
      %p104 = scmp.eq.s32.totalorder %s17, 0
      %p105 = por %p103, %p104
      %p106 = scmp.ne.s32.totalorder %s95, %s98
      %p107 = scmp.eq.s32.totalorder %s22, 1
      %p108 = por %p106, %p107
      %p109 = scmp.ne.s32.totalorder %s98, %s99
      %p110 = scmp.eq.s32.totalorder %s22, 0
      %p111 = por %p109, %p110
      %p112 = scmp.ne.s32.totalorder %s98, %s99
      %p113 = scmp.eq.s32.totalorder %s23, 1
      %p114 = por %p112, %p113
      %p116 = scmp.ne.s32.totalorder %s99, %s115
      %p117 = scmp.eq.s32.totalorder %s23, 0
      %p118 = por %p116, %p117
      %p119 = scmp.le.s32.totalorder 1, %s17
      %p120 = scmp.lt.s32.totalorder %s17, 3
      %p121 = pnand %p119, %p120
      %p122 = pneg %p121
      // Predicated region
      $region9: #{tpu_custom_call.1} parent=5 // pred_check
        _
      $region10: #{tpu_custom_call.1} parent=5 // pred_check_branch
        %124 = sbr.rel (%p121) target = $region12
      $region11: #{tpu_custom_call.1} parent=5 // pred_region
        %s125 = ssub.s32 %s17, 1
        // Predicated region
        $region13: #{tpu_custom_call.1} parent=11 // pred_check
          %p126 = pneg %p64
        $region14: #{tpu_custom_call.1} parent=11 // pred_check_branch
          %128 = sbr.rel (%p126) target = $region16
        $region15: #{tpu_custom_call.1} parent=11 // pred_region
          %130 = vsyncadd [#allocation7], 0
          %s132 = sshll.u32 %s1, 4
          %s133 = int_to_ptr.vmem [resolvable:$true] %s132
          %135 = dma.vmem_to_smem %s133, 16, [#allocation8], [#allocation7]
        $region16: #{tpu_custom_call.1} parent=11 // pred_fallthru
          _
        // Predicated region
        $region17: #{tpu_custom_call.1} parent=11 // pred_check
          %p136 = pneg %p85
        $region18: #{tpu_custom_call.1} parent=11 // pred_check_branch
          %138 = sbr.rel (%p136) target = $region20
        $region19: #{tpu_custom_call.1} parent=11 // pred_region
          _
        $region20: #{tpu_custom_call.1} parent=11 // pred_fallthru
          _
      $region12: #{tpu_custom_call.1} parent=5 // pred_fallthru
        _
      %p139 = scmp.lt.s32.totalorder %s17, 2
      // Predicated region
      $region21: #{tpu_custom_call.1} parent=5 // pred_check
        %p140 = pneg %p139
      $region22: #{tpu_custom_call.1} parent=5 // pred_check_branch
        %142 = sbr.rel (%p140) target = $region24
      $region23: #{tpu_custom_call.1} parent=5 // pred_region
        // Predicated region
        $region25: #{tpu_custom_call.1} parent=23 // pred_check
          %p143 = pneg %p37
        $region26: #{tpu_custom_call.1} parent=23 // pred_check_branch
          %145 = sbr.rel (%p143) target = $region28
        $region27: #{tpu_custom_call.1} parent=23 // pred_region
          %s146 = sand.u32 %s27, 1
          %s147 = scalar_lea.sflag [#allocation5], %s146
          %s148 = sand.u32 %s27, 1
          %s149 = smul.addr %s148, 64
          %s150 = scalar_lea.vmem [#allocation4], %s149
          %152 = vsyncadd %s147, 0
          %s153 = smul.addr %s17, 8
          %s154 = smul.addr %s153, 8
          %s155 = scalar_lea.hbm %s0, %s154
          %s156 = sshll.u32 %s155, 4
          %s157 = int_to_ptr.hbm [resolvable:$true] %s156
          %s158 = sshll.u32 %s150, 4
          %s159 = int_to_ptr.vmem [resolvable:$true] %s158
          %164 = dma.hbm_to_vmem [thread:$0]  %s157, 1024, %s159, %s147, 128, 128, 8
        $region28: #{tpu_custom_call.1} parent=23 // pred_fallthru
          _
      $region24: #{tpu_custom_call.1} parent=5 // pred_fallthru
        _
      %p165 = scmp.le.s32.totalorder 1, %s17
      %p166 = scmp.lt.s32.totalorder %s17, 3
      %p167 = pnand %p165, %p166
      %p168 = pneg %p167
      // Predicated region
      $region29: #{tpu_custom_call.1} parent=5 // pred_check
        _
      $region30: #{tpu_custom_call.1} parent=5 // pred_check_branch
        %170 = sbr.rel (%p167) target = $region32
      $region31: #{tpu_custom_call.1} parent=5 // pred_region
        %s171 = ssub.s32 %s17, 1
        %s172 = sand.u32 %s30, 1
        %s173 = scalar_lea.sflag [#allocation5], %s172
        %s174 = sand.u32 %s30, 1
        %s175 = smul.addr %s174, 64
        %s176 = scalar_lea.vmem [#allocation4], %s175
        // Predicated region
        $region33: #{tpu_custom_call.1} parent=31 // pred_check
          %p177 = pneg %p43
        $region34: #{tpu_custom_call.1} parent=31 // pred_check_branch
          %179 = sbr.rel (%p177) target = $region36
        $region35: #{tpu_custom_call.1} parent=31 // pred_region
          %181 = dma.done %s173, 1024
        $region36: #{tpu_custom_call.1} parent=31 // pred_fallthru
          _
        // Predicated region
        $region37: #{tpu_custom_call.1} parent=31 // pred_check
          %p182 = pneg %p64
        $region38: #{tpu_custom_call.1} parent=31 // pred_check_branch
          %184 = sbr.rel (%p182) target = $region40
        $region39: #{tpu_custom_call.1} parent=31 // pred_region
          %186 = dma.done [#allocation7], 16
        $region40: #{tpu_custom_call.1} parent=31 // pred_fallthru
          _
        %187 = sfence
        %s188 = sand.u32 %s30, 1
        %s189 = scalar_lea.sflag [#allocation5], %s188
        %s190 = sand.u32 %s30, 1
        %s191 = smul.addr %s190, 64
        %s192 = scalar_lea.vmem [#allocation4], %s191
        %p193 = pneg %p43
        %p194 = pneg %p40
        %p195 = pneg %p64
        %p196 = pneg %p61
        %p197 = pneg %p85
        %p198 = pneg %p82
        %p199 = pneg %p111
        %p200 = pneg %p108
        %s201 = sand.u32 %s98, 1
        %s202 = scalar_lea.sflag [#allocation6], %s201
        %s203 = sand.u32 %s98, 1
        %s204 = smul.addr %s203, 64
        %s205 = scalar_lea.vmem [#allocation9], %s204
        %v206 = vld [vmem:[%s176] sm:$0xff]
        %v207 = vld [vmem:[%s176 + $0x8] sm:$0xff]
        %v208 = vld [vmem:[%s176 + $0x10] sm:$0xff]
        %v209 = vld [vmem:[%s176 + $0x18] sm:$0xff]
        %v210 = vld [vmem:[%s176 + $0x20] sm:$0xff]
        %v211 = vld [vmem:[%s176 + $0x28] sm:$0xff]
        %v212 = vld [vmem:[%s176 + $0x30] sm:$0xff]
        %v213 = vld [vmem:[%s176 + $0x38] sm:$0xff]
        %vm214 = vcmask 130048
        %v215 = vsel %vm214, %v206, 0.0
        %v216 = vsel %vm214, %v208, 0.0
        %v217 = vadd.f32 %v215, %v216
        %v218 = vsel %vm214, %v210, 0.0
        %v219 = vadd.f32 %v217, %v218
        %v220 = vsel %vm214, %v212, 0.0
        %v221 = vadd.f32 %v219, %v220
        %v222 = vsel %vm214, %v207, 0.0
        %v223 = vsel %vm214, %v209, 0.0
        %v224 = vadd.f32 %v222, %v223
        %v225 = vsel %vm214, %v211, 0.0
        %v226 = vadd.f32 %v224, %v225
        %v227 = vsel %vm214, %v213, 0.0
        %v228 = vadd.f32 %v226, %v227
        %v229 = vrcp.pop 4.0
        %v230 = vmul.f32 4.0, %v229
        %v231 = vsub.f32 1.0, %v230
        %v232 = vmul.f32 %v229, %v231
        %v233 = vadd.f32 %v229, %v232
        %vm234 = vweird.f32 %v229
        %v235 = vsel %vm234, %v229, %v233
        %v236 = vmul.f32 %v221, %v235
        %v237 = vmul.f32 %v228, %v235
        %v238 = vsel %vm214, %v206, -inf
        %v239 = vsel %vm214, %v208, -inf
        %v240 = vsel %vm214, %v210, -inf
        %v241 = vmax.f32 %v238, %v240
        %v242 = vsel %vm214, %v212, -inf
        %v243 = vmax.f32 %v239, %v242
        %v244 = vmax.f32 %v241, %v243
        %v245 = vsel %vm214, %v207, -inf
        %v246 = vsel %vm214, %v209, -inf
        %v247 = vsel %vm214, %v211, -inf
        %v248 = vmax.f32 %v245, %v247
        %v249 = vsel %vm214, %v213, -inf
        %v250 = vmax.f32 %v246, %v249
        %v251 = vmax.f32 %v248, %v250
        %vm252 = vcmask 179200
        %253 = vst.msk [vmem:[#allocation2] sm:$0xff] %vm252, 0.0
        %254 = vst.msk [vmem:[#allocation2 + $0x8] sm:$0xff] %vm252, 0.0
        %vm255 = vcmask 177152
        %256 = vst.msk [vmem:[#allocation2 + $0x10] sm:$0x3f] %vm255, 0.0
        %257 = vst.msk [vmem:[#allocation2 + $0x18] sm:$0xff] %vm252, 0.0
        %258 = vst.msk [vmem:[#allocation2 + $0x20] sm:$0xff] %vm252, 0.0
        %259 = vst.msk [vmem:[#allocation2 + $0x28] sm:$0x3f] %vm255, 0.0
        %262 = vrot.lane.b32.xlu0 %v236, 3
        %v263 = vpop.permute.xlu0 %262
        %264 = vrot.lane.b32.xlu0 %v237, 3
        %v265 = vpop.permute.xlu0 %264
        %vm268 = vcmask 154648
        %269 = vst.msk [vmem:[#allocation2 + $0x3] sm:$0xff] %vm268, %v263
        %270 = vst.msk [vmem:[#allocation2 + $0xb] sm:$0xff] %vm268, %v265
        %273 = vrot.lane.b32.xlu0 %v244, 3
        %v274 = vpop.permute.xlu0 %273
        %275 = vrot.lane.b32.xlu0 %v251, 3
        %v276 = vpop.permute.xlu0 %275
        %s279 = scalar_lea.vmem [#allocation2], 24
        %280 = vst.msk [vmem:[%s279 + $0x3] sm:$0xff] %vm268, %v274
        %281 = vst.msk [vmem:[%s279 + $0xb] sm:$0xff] %vm268, %v276
        %s282 = sld [smem:[#allocation3]]
        %v283 = vstv %s282
        %v284 = vld [vmem:[#allocation2] sm:$0xff]
        %v285 = vld [vmem:[#allocation2 + $0x8] sm:$0xff]
        %s286 = sld [smem:[#allocation8]]
        %v287 = vstv %s286
        %v288 = vmul.f32 %v287, %v284
        %v289 = vmul.f32 %v287, %v285
        %v290 = vadd.f32 %v283, %v288
        %v291 = vadd.f32 %v283, %v289
        %s292 = sld [smem:[#allocation8 + $0x1]]
        %v293 = vstv %s292
        %v294 = vmul.f32 %v293, %v284
        %v295 = vmul.f32 %v293, %v285
        %298 = vrot.lane.b32.xlu0 %v294, 127
        %v299 = vpop.permute.xlu0 %298
        %300 = vrot.lane.b32.xlu0 %v295, 127
        %v301 = vpop.permute.xlu0 %300
        %v304 = vadd.f32 %v290, %v299
        %v305 = vadd.f32 %v291, %v301
        %s306 = sld [smem:[#allocation8 + $0x2]]
        %v307 = vstv %s306
        %v308 = vmul.f32 %v307, %v284
        %v309 = vmul.f32 %v307, %v285
        %312 = vrot.lane.b32.xlu0 %v308, 126
        %v313 = vpop.permute.xlu0 %312
        %314 = vrot.lane.b32.xlu0 %v309, 126
        %v315 = vpop.permute.xlu0 %314
        %v318 = vadd.f32 %v304, %v313
        %v319 = vadd.f32 %v305, %v315
        %s320 = sld [smem:[#allocation8 + $0x3]]
        %v321 = vstv %s320
        %v322 = vmul.f32 %v321, %v284
        %v323 = vmul.f32 %v321, %v285
        %326 = vrot.lane.b32.xlu0 %v322, 125
        %v327 = vpop.permute.xlu0 %326
        %328 = vrot.lane.b32.xlu0 %v323, 125
        %v329 = vpop.permute.xlu0 %328
        %v332 = vadd.f32 %v318, %v327
        %v333 = vadd.f32 %v319, %v329
        %s334 = sld [smem:[#allocation8 + $0x4]]
        %v335 = vstv %s334
        %v336 = vmul.f32 %v335, %v284
        %v337 = vmul.f32 %v335, %v285
        %340 = vrot.lane.b32.xlu0 %v336, 124
        %v341 = vpop.permute.xlu0 %340
        %342 = vrot.lane.b32.xlu0 %v337, 124
        %v343 = vpop.permute.xlu0 %342
        %v346 = vadd.f32 %v332, %v341
        %v347 = vadd.f32 %v333, %v343
        %s348 = sld [smem:[#allocation8 + $0x5]]
        %v349 = vstv %s348
        %v350 = vmul.f32 %v349, %v284
        %v351 = vmul.f32 %v349, %v285
        %354 = vrot.lane.b32.xlu0 %v350, 123
        %v355 = vpop.permute.xlu0 %354
        %356 = vrot.lane.b32.xlu0 %v351, 123
        %v357 = vpop.permute.xlu0 %356
        %v360 = vadd.f32 %v346, %v355
        %v361 = vadd.f32 %v347, %v357
        %s362 = sld [smem:[#allocation8 + $0x6]]
        %v363 = vstv %s362
        %v364 = vmul.f32 %v363, %v284
        %v365 = vmul.f32 %v363, %v285
        %368 = vrot.lane.b32.xlu0 %v364, 122
        %v369 = vpop.permute.xlu0 %368
        %370 = vrot.lane.b32.xlu0 %v365, 122
        %v371 = vpop.permute.xlu0 %370
        %v374 = vadd.f32 %v360, %v369
        %v375 = vadd.f32 %v361, %v371
        %v376 = vld [vmem:[#allocation2 + $0x1] sm:$0xff]
        %v377 = vld [vmem:[#allocation2 + $0x9] sm:$0xff]
        %s378 = sld [smem:[#allocation8 + $0x7]]
        %v379 = vstv %s378
        %v380 = vmul.f32 %v379, %v376
        %v381 = vmul.f32 %v379, %v377
        %v382 = vadd.f32 %v374, %v380
        %v383 = vadd.f32 %v375, %v381
        %s384 = sld [smem:[#allocation8 + $0x8]]
        %v385 = vstv %s384
        %v386 = vmul.f32 %v385, %v376
        %v387 = vmul.f32 %v385, %v377
        %390 = vrot.lane.b32.xlu0 %v386, 127
        %v391 = vpop.permute.xlu0 %390
        %392 = vrot.lane.b32.xlu0 %v387, 127
        %v393 = vpop.permute.xlu0 %392
        %v396 = vadd.f32 %v382, %v391
        %v397 = vadd.f32 %v383, %v393
        %s398 = sld [smem:[#allocation8 + $0x9]]
        %v399 = vstv %s398
        %v400 = vmul.f32 %v399, %v376
        %v401 = vmul.f32 %v399, %v377
        %404 = vrot.lane.b32.xlu0 %v400, 126
        %v405 = vpop.permute.xlu0 %404
        %406 = vrot.lane.b32.xlu0 %v401, 126
        %v407 = vpop.permute.xlu0 %406
        %v410 = vadd.f32 %v396, %v405
        %v411 = vadd.f32 %v397, %v407
        %s412 = sld [smem:[#allocation8 + $0xa]]
        %v413 = vstv %s412
        %v414 = vmul.f32 %v413, %v376
        %v415 = vmul.f32 %v413, %v377
        %418 = vrot.lane.b32.xlu0 %v414, 125
        %v419 = vpop.permute.xlu0 %418
        %420 = vrot.lane.b32.xlu0 %v415, 125
        %v421 = vpop.permute.xlu0 %420
        %v424 = vadd.f32 %v410, %v419
        %v425 = vadd.f32 %v411, %v421
        %s426 = sld [smem:[#allocation8 + $0xb]]
        %v427 = vstv %s426
        %v428 = vmul.f32 %v427, %v376
        %v429 = vmul.f32 %v427, %v377
        %432 = vrot.lane.b32.xlu0 %v428, 124
        %v433 = vpop.permute.xlu0 %432
        %434 = vrot.lane.b32.xlu0 %v429, 124
        %v435 = vpop.permute.xlu0 %434
        %v438 = vadd.f32 %v424, %v433
        %v439 = vadd.f32 %v425, %v435
        %s440 = sld [smem:[#allocation8 + $0xc]]
        %v441 = vstv %s440
        %v442 = vmul.f32 %v441, %v376
        %v443 = vmul.f32 %v441, %v377
        %446 = vrot.lane.b32.xlu0 %v442, 123
        %v447 = vpop.permute.xlu0 %446
        %448 = vrot.lane.b32.xlu0 %v443, 123
        %v449 = vpop.permute.xlu0 %448
        %v452 = vadd.f32 %v438, %v447
        %v453 = vadd.f32 %v439, %v449
        %s454 = sld [smem:[#allocation8 + $0xd]]
        %v455 = vstv %s454
        %v456 = vmul.f32 %v455, %v376
        %v457 = vmul.f32 %v455, %v377
        %460 = vrot.lane.b32.xlu0 %v456, 122
        %v461 = vpop.permute.xlu0 %460
        %462 = vrot.lane.b32.xlu0 %v457, 122
        %v463 = vpop.permute.xlu0 %462
        %v466 = vadd.f32 %v452, %v461
        %v467 = vadd.f32 %v453, %v463
        %v468 = vld [vmem:[#allocation2 + $0x2] sm:$0xff]
        %v469 = vld [vmem:[#allocation2 + $0xa] sm:$0xff]
        %s470 = sld [smem:[#allocation8 + $0xe]]
        %v471 = vstv %s470
        %v472 = vmul.f32 %v471, %v468
        %v473 = vmul.f32 %v471, %v469
        %v474 = vadd.f32 %v466, %v472
        %v475 = vadd.f32 %v467, %v473
        %s476 = sld [smem:[#allocation8 + $0xf]]
        %v477 = vstv %s476
        %v478 = vmul.f32 %v477, %v468
        %v479 = vmul.f32 %v477, %v469
        %482 = vrot.lane.b32.xlu0 %v478, 127
        %v483 = vpop.permute.xlu0 %482
        %484 = vrot.lane.b32.xlu0 %v479, 127
        %v485 = vpop.permute.xlu0 %484
        %v488 = vadd.f32 %v474, %v483
        %v489 = vadd.f32 %v475, %v485
        %s490 = sld [smem:[#allocation8 + $0x10]]
        %v491 = vstv %s490
        %v492 = vmul.f32 %v491, %v468
        %v493 = vmul.f32 %v491, %v469
        %496 = vrot.lane.b32.xlu0 %v492, 126
        %v497 = vpop.permute.xlu0 %496
        %498 = vrot.lane.b32.xlu0 %v493, 126
        %v499 = vpop.permute.xlu0 %498
        %v502 = vadd.f32 %v488, %v497
        %v503 = vadd.f32 %v489, %v499
        %s504 = sld [smem:[#allocation8 + $0x11]]
        %v505 = vstv %s504
        %v506 = vmul.f32 %v505, %v468
        %v507 = vmul.f32 %v505, %v469
        %510 = vrot.lane.b32.xlu0 %v506, 125
        %v511 = vpop.permute.xlu0 %510
        %512 = vrot.lane.b32.xlu0 %v507, 125
        %v513 = vpop.permute.xlu0 %512
        %v516 = vadd.f32 %v502, %v511
        %v517 = vadd.f32 %v503, %v513
        %s518 = sld [smem:[#allocation8 + $0x12]]
        %v519 = vstv %s518
        %v520 = vmul.f32 %v519, %v468
        %v521 = vmul.f32 %v519, %v469
        %524 = vrot.lane.b32.xlu0 %v520, 124
        %v525 = vpop.permute.xlu0 %524
        %526 = vrot.lane.b32.xlu0 %v521, 124
        %v527 = vpop.permute.xlu0 %526
        %v530 = vadd.f32 %v516, %v525
        %v531 = vadd.f32 %v517, %v527
        %s532 = sld [smem:[#allocation8 + $0x13]]
        %v533 = vstv %s532
        %v534 = vmul.f32 %v533, %v468
        %v535 = vmul.f32 %v533, %v469
        %538 = vrot.lane.b32.xlu0 %v534, 123
        %v539 = vpop.permute.xlu0 %538
        %540 = vrot.lane.b32.xlu0 %v535, 123
        %v541 = vpop.permute.xlu0 %540
        %v544 = vadd.f32 %v530, %v539
        %v545 = vadd.f32 %v531, %v541
        %s546 = sld [smem:[#allocation8 + $0x14]]
        %v547 = vstv %s546
        %v548 = vmul.f32 %v547, %v468
        %v549 = vmul.f32 %v547, %v469
        %552 = vrot.lane.b32.xlu0 %v548, 122
        %v553 = vpop.permute.xlu0 %552
        %554 = vrot.lane.b32.xlu0 %v549, 122
        %v555 = vpop.permute.xlu0 %554
        %v558 = vadd.f32 %v544, %v553
        %v559 = vadd.f32 %v545, %v555
        %v560 = vld [vmem:[#allocation2 + $0x3] sm:$0xff]
        %v561 = vld [vmem:[#allocation2 + $0xb] sm:$0xff]
        %s562 = sld [smem:[#allocation8 + $0x15]]
        %v563 = vstv %s562
        %v564 = vmul.f32 %v563, %v560
        %v565 = vmul.f32 %v563, %v561
        %v566 = vadd.f32 %v558, %v564
        %v567 = vadd.f32 %v559, %v565
        %s568 = sld [smem:[#allocation8 + $0x16]]
        %v569 = vstv %s568
        %v570 = vmul.f32 %v569, %v560
        %v571 = vmul.f32 %v569, %v561
        %574 = vrot.lane.b32.xlu0 %v570, 127
        %v575 = vpop.permute.xlu0 %574
        %576 = vrot.lane.b32.xlu0 %v571, 127
        %v577 = vpop.permute.xlu0 %576
        %v580 = vadd.f32 %v566, %v575
        %v581 = vadd.f32 %v567, %v577
        %s582 = sld [smem:[#allocation8 + $0x17]]
        %v583 = vstv %s582
        %v584 = vmul.f32 %v583, %v560
        %v585 = vmul.f32 %v583, %v561
        %588 = vrot.lane.b32.xlu0 %v584, 126
        %v589 = vpop.permute.xlu0 %588
        %590 = vrot.lane.b32.xlu0 %v585, 126
        %v591 = vpop.permute.xlu0 %590
        %v594 = vadd.f32 %v580, %v589
        %v595 = vadd.f32 %v581, %v591
        %s596 = sld [smem:[#allocation8 + $0x18]]
        %v597 = vstv %s596
        %v598 = vmul.f32 %v597, %v560
        %v599 = vmul.f32 %v597, %v561
        %602 = vrot.lane.b32.xlu0 %v598, 125
        %v603 = vpop.permute.xlu0 %602
        %604 = vrot.lane.b32.xlu0 %v599, 125
        %v605 = vpop.permute.xlu0 %604
        %v608 = vadd.f32 %v594, %v603
        %v609 = vadd.f32 %v595, %v605
        %s610 = sld [smem:[#allocation8 + $0x19]]
        %v611 = vstv %s610
        %v612 = vmul.f32 %v611, %v560
        %v613 = vmul.f32 %v611, %v561
        %616 = vrot.lane.b32.xlu0 %v612, 124
        %v617 = vpop.permute.xlu0 %616
        %618 = vrot.lane.b32.xlu0 %v613, 124
        %v619 = vpop.permute.xlu0 %618
        %v622 = vadd.f32 %v608, %v617
        %v623 = vadd.f32 %v609, %v619
        %s624 = sld [smem:[#allocation8 + $0x1a]]
        %v625 = vstv %s624
        %v626 = vmul.f32 %v625, %v560
        %v627 = vmul.f32 %v625, %v561
        %630 = vrot.lane.b32.xlu0 %v626, 123
        %v631 = vpop.permute.xlu0 %630
        %632 = vrot.lane.b32.xlu0 %v627, 123
        %v633 = vpop.permute.xlu0 %632
        %v636 = vadd.f32 %v622, %v631
        %v637 = vadd.f32 %v623, %v633
        %s638 = sld [smem:[#allocation8 + $0x1b]]
        %v639 = vstv %s638
        %v640 = vmul.f32 %v639, %v560
        %v641 = vmul.f32 %v639, %v561
        %644 = vrot.lane.b32.xlu0 %v640, 122
        %v645 = vpop.permute.xlu0 %644
        %646 = vrot.lane.b32.xlu0 %v641, 122
        %v647 = vpop.permute.xlu0 %646
        %v650 = vadd.f32 %v636, %v645
        %v651 = vadd.f32 %v637, %v647
        %v652 = vld [vmem:[#allocation2 + $0x4] sm:$0xff]
        %v653 = vld [vmem:[#allocation2 + $0xc] sm:$0xff]
        %s654 = sld [smem:[#allocation8 + $0x1c]]
        %v655 = vstv %s654
        %v656 = vmul.f32 %v655, %v652
        %v657 = vmul.f32 %v655, %v653
        %v658 = vadd.f32 %v650, %v656
        %v659 = vadd.f32 %v651, %v657
        %s660 = sld [smem:[#allocation8 + $0x1d]]
        %v661 = vstv %s660
        %v662 = vmul.f32 %v661, %v652
        %v663 = vmul.f32 %v661, %v653
        %666 = vrot.lane.b32.xlu0 %v662, 127
        %v667 = vpop.permute.xlu0 %666
        %668 = vrot.lane.b32.xlu0 %v663, 127
        %v669 = vpop.permute.xlu0 %668
        %v672 = vadd.f32 %v658, %v667
        %v673 = vadd.f32 %v659, %v669
        %s674 = sld [smem:[#allocation8 + $0x1e]]
        %v675 = vstv %s674
        %v676 = vmul.f32 %v675, %v652
        %v677 = vmul.f32 %v675, %v653
        %680 = vrot.lane.b32.xlu0 %v676, 126
        %v681 = vpop.permute.xlu0 %680
        %682 = vrot.lane.b32.xlu0 %v677, 126
        %v683 = vpop.permute.xlu0 %682
        %v686 = vadd.f32 %v672, %v681
        %v687 = vadd.f32 %v673, %v683
        %s688 = sld [smem:[#allocation8 + $0x1f]]
        %v689 = vstv %s688
        %v690 = vmul.f32 %v689, %v652
        %v691 = vmul.f32 %v689, %v653
        %694 = vrot.lane.b32.xlu0 %v690, 125
        %v695 = vpop.permute.xlu0 %694
        %696 = vrot.lane.b32.xlu0 %v691, 125
        %v697 = vpop.permute.xlu0 %696
        %v700 = vadd.f32 %v686, %v695
        %v701 = vadd.f32 %v687, %v697
        %s702 = sld [smem:[#allocation8 + $0x20]]
        %v703 = vstv %s702
        %v704 = vmul.f32 %v703, %v652
        %v705 = vmul.f32 %v703, %v653
        %708 = vrot.lane.b32.xlu0 %v704, 124
        %v709 = vpop.permute.xlu0 %708
        %710 = vrot.lane.b32.xlu0 %v705, 124
        %v711 = vpop.permute.xlu0 %710
        %v714 = vadd.f32 %v700, %v709
        %v715 = vadd.f32 %v701, %v711
        %s716 = sld [smem:[#allocation8 + $0x21]]
        %v717 = vstv %s716
        %v718 = vmul.f32 %v717, %v652
        %v719 = vmul.f32 %v717, %v653
        %722 = vrot.lane.b32.xlu0 %v718, 123
        %v723 = vpop.permute.xlu0 %722
        %724 = vrot.lane.b32.xlu0 %v719, 123
        %v725 = vpop.permute.xlu0 %724
        %v728 = vadd.f32 %v714, %v723
        %v729 = vadd.f32 %v715, %v725
        %s730 = sld [smem:[#allocation8 + $0x22]]
        %v731 = vstv %s730
        %v732 = vmul.f32 %v731, %v652
        %v733 = vmul.f32 %v731, %v653
        %736 = vrot.lane.b32.xlu0 %v732, 122
        %v737 = vpop.permute.xlu0 %736
        %738 = vrot.lane.b32.xlu0 %v733, 122
        %v739 = vpop.permute.xlu0 %738
        %v742 = vadd.f32 %v728, %v737
        %v743 = vadd.f32 %v729, %v739
        %v744 = vld [vmem:[#allocation2 + $0x5] sm:$0xff]
        %v745 = vld [vmem:[#allocation2 + $0xd] sm:$0xff]
        %s746 = sld [smem:[#allocation8 + $0x23]]
        %v747 = vstv %s746
        %v748 = vmul.f32 %v747, %v744
        %v749 = vmul.f32 %v747, %v745
        %v750 = vadd.f32 %v742, %v748
        %v751 = vadd.f32 %v743, %v749
        %s752 = sld [smem:[#allocation8 + $0x24]]
        %v753 = vstv %s752
        %v754 = vmul.f32 %v753, %v744
        %v755 = vmul.f32 %v753, %v745
        %758 = vrot.lane.b32.xlu0 %v754, 127
        %v759 = vpop.permute.xlu0 %758
        %760 = vrot.lane.b32.xlu0 %v755, 127
        %v761 = vpop.permute.xlu0 %760
        %v764 = vadd.f32 %v750, %v759
        %v765 = vadd.f32 %v751, %v761
        %s766 = sld [smem:[#allocation8 + $0x25]]
        %v767 = vstv %s766
        %v768 = vmul.f32 %v767, %v744
        %v769 = vmul.f32 %v767, %v745
        %772 = vrot.lane.b32.xlu0 %v768, 126
        %v773 = vpop.permute.xlu0 %772
        %774 = vrot.lane.b32.xlu0 %v769, 126
        %v775 = vpop.permute.xlu0 %774
        %v778 = vadd.f32 %v764, %v773
        %v779 = vadd.f32 %v765, %v775
        %s780 = sld [smem:[#allocation8 + $0x26]]
        %v781 = vstv %s780
        %v782 = vmul.f32 %v781, %v744
        %v783 = vmul.f32 %v781, %v745
        %786 = vrot.lane.b32.xlu0 %v782, 125
        %v787 = vpop.permute.xlu0 %786
        %788 = vrot.lane.b32.xlu0 %v783, 125
        %v789 = vpop.permute.xlu0 %788
        %v792 = vadd.f32 %v778, %v787
        %v793 = vadd.f32 %v779, %v789
        %s794 = sld [smem:[#allocation8 + $0x27]]
        %v795 = vstv %s794
        %v796 = vmul.f32 %v795, %v744
        %v797 = vmul.f32 %v795, %v745
        %800 = vrot.lane.b32.xlu0 %v796, 124
        %v801 = vpop.permute.xlu0 %800
        %802 = vrot.lane.b32.xlu0 %v797, 124
        %v803 = vpop.permute.xlu0 %802
        %v806 = vadd.f32 %v792, %v801
        %v807 = vadd.f32 %v793, %v803
        %s808 = sld [smem:[#allocation8 + $0x28]]
        %v809 = vstv %s808
        %v810 = vmul.f32 %v809, %v744
        %v811 = vmul.f32 %v809, %v745
        %814 = vrot.lane.b32.xlu0 %v810, 123
        %v815 = vpop.permute.xlu0 %814
        %816 = vrot.lane.b32.xlu0 %v811, 123
        %v817 = vpop.permute.xlu0 %816
        %v820 = vadd.f32 %v806, %v815
        %v821 = vadd.f32 %v807, %v817
        %s822 = sld [smem:[#allocation8 + $0x29]]
        %v823 = vstv %s822
        %v824 = vmul.f32 %v823, %v744
        %v825 = vmul.f32 %v823, %v745
        %828 = vrot.lane.b32.xlu0 %v824, 122
        %v829 = vpop.permute.xlu0 %828
        %830 = vrot.lane.b32.xlu0 %v825, 122
        %v831 = vpop.permute.xlu0 %830
        %v834 = vadd.f32 %v820, %v829
        %v835 = vadd.f32 %v821, %v831
        %v836 = vld [vmem:[#allocation2 + $0x6] sm:$0xff]
        %v837 = vld [vmem:[#allocation2 + $0xe] sm:$0xff]
        %s838 = sld [smem:[#allocation8 + $0x2a]]
        %v839 = vstv %s838
        %v840 = vmul.f32 %v839, %v836
        %v841 = vmul.f32 %v839, %v837
        %v842 = vadd.f32 %v834, %v840
        %v843 = vadd.f32 %v835, %v841
        %s844 = sld [smem:[#allocation8 + $0x2b]]
        %v845 = vstv %s844
        %v846 = vmul.f32 %v845, %v836
        %v847 = vmul.f32 %v845, %v837
        %850 = vrot.lane.b32.xlu0 %v846, 127
        %v851 = vpop.permute.xlu0 %850
        %852 = vrot.lane.b32.xlu0 %v847, 127
        %v853 = vpop.permute.xlu0 %852
        %v856 = vadd.f32 %v842, %v851
        %v857 = vadd.f32 %v843, %v853
        %s858 = sld [smem:[#allocation8 + $0x2c]]
        %v859 = vstv %s858
        %v860 = vmul.f32 %v859, %v836
        %v861 = vmul.f32 %v859, %v837
        %864 = vrot.lane.b32.xlu0 %v860, 126
        %v865 = vpop.permute.xlu0 %864
        %866 = vrot.lane.b32.xlu0 %v861, 126
        %v867 = vpop.permute.xlu0 %866
        %v870 = vadd.f32 %v856, %v865
        %v871 = vadd.f32 %v857, %v867
        %s872 = sld [smem:[#allocation8 + $0x2d]]
        %v873 = vstv %s872
        %v874 = vmul.f32 %v873, %v836
        %v875 = vmul.f32 %v873, %v837
        %878 = vrot.lane.b32.xlu0 %v874, 125
        %v879 = vpop.permute.xlu0 %878
        %880 = vrot.lane.b32.xlu0 %v875, 125
        %v881 = vpop.permute.xlu0 %880
        %v884 = vadd.f32 %v870, %v879
        %v885 = vadd.f32 %v871, %v881
        %s886 = sld [smem:[#allocation8 + $0x2e]]
        %v887 = vstv %s886
        %v888 = vmul.f32 %v887, %v836
        %v889 = vmul.f32 %v887, %v837
        %892 = vrot.lane.b32.xlu0 %v888, 124
        %v893 = vpop.permute.xlu0 %892
        %894 = vrot.lane.b32.xlu0 %v889, 124
        %v895 = vpop.permute.xlu0 %894
        %v898 = vadd.f32 %v884, %v893
        %v899 = vadd.f32 %v885, %v895
        %s900 = sld [smem:[#allocation8 + $0x2f]]
        %v901 = vstv %s900
        %v902 = vmul.f32 %v901, %v836
        %v903 = vmul.f32 %v901, %v837
        %906 = vrot.lane.b32.xlu0 %v902, 123
        %v907 = vpop.permute.xlu0 %906
        %908 = vrot.lane.b32.xlu0 %v903, 123
        %v909 = vpop.permute.xlu0 %908
        %v912 = vadd.f32 %v898, %v907
        %v913 = vadd.f32 %v899, %v909
        %s914 = sld [smem:[#allocation8 + $0x30]]
        %v915 = vstv %s914
        %v916 = vmul.f32 %v915, %v836
        %v917 = vmul.f32 %v915, %v837
        %920 = vrot.lane.b32.xlu0 %v916, 122
        %v921 = vpop.permute.xlu0 %920
        %922 = vrot.lane.b32.xlu0 %v917, 122
        %v923 = vpop.permute.xlu0 %922
        %v926 = vadd.f32 %v912, %v921
        %v927 = vadd.f32 %v913, %v923
        %v928 = vld [vmem:[%s279] sm:$0xff]
        %v929 = vld [vmem:[%s279 + $0x8] sm:$0xff]
        %s930 = sld [smem:[#allocation8 + $0x31]]
        %v931 = vstv %s930
        %v932 = vmul.f32 %v931, %v928
        %v933 = vmul.f32 %v931, %v929
        %v934 = vadd.f32 %v926, %v932
        %v935 = vadd.f32 %v927, %v933
        %s936 = sld [smem:[#allocation8 + $0x32]]
        %v937 = vstv %s936
        %v938 = vmul.f32 %v937, %v928
        %v939 = vmul.f32 %v937, %v929
        %942 = vrot.lane.b32.xlu0 %v938, 127
        %v943 = vpop.permute.xlu0 %942
        %944 = vrot.lane.b32.xlu0 %v939, 127
        %v945 = vpop.permute.xlu0 %944
        %v948 = vadd.f32 %v934, %v943
        %v949 = vadd.f32 %v935, %v945
        %s950 = sld [smem:[#allocation8 + $0x33]]
        %v951 = vstv %s950
        %v952 = vmul.f32 %v951, %v928
        %v953 = vmul.f32 %v951, %v929
        %956 = vrot.lane.b32.xlu0 %v952, 126
        %v957 = vpop.permute.xlu0 %956
        %958 = vrot.lane.b32.xlu0 %v953, 126
        %v959 = vpop.permute.xlu0 %958
        %v962 = vadd.f32 %v948, %v957
        %v963 = vadd.f32 %v949, %v959
        %s964 = sld [smem:[#allocation8 + $0x34]]
        %v965 = vstv %s964
        %v966 = vmul.f32 %v965, %v928
        %v967 = vmul.f32 %v965, %v929
        %970 = vrot.lane.b32.xlu0 %v966, 125
        %v971 = vpop.permute.xlu0 %970
        %972 = vrot.lane.b32.xlu0 %v967, 125
        %v973 = vpop.permute.xlu0 %972
        %v976 = vadd.f32 %v962, %v971
        %v977 = vadd.f32 %v963, %v973
        %s978 = sld [smem:[#allocation8 + $0x35]]
        %v979 = vstv %s978
        %v980 = vmul.f32 %v979, %v928
        %v981 = vmul.f32 %v979, %v929
        %984 = vrot.lane.b32.xlu0 %v980, 124
        %v985 = vpop.permute.xlu0 %984
        %986 = vrot.lane.b32.xlu0 %v981, 124
        %v987 = vpop.permute.xlu0 %986
        %v990 = vadd.f32 %v976, %v985
        %v991 = vadd.f32 %v977, %v987
        %s992 = sld [smem:[#allocation8 + $0x36]]
        %v993 = vstv %s992
        %v994 = vmul.f32 %v993, %v928
        %v995 = vmul.f32 %v993, %v929
        %998 = vrot.lane.b32.xlu0 %v994, 123
        %v999 = vpop.permute.xlu0 %998
        %1000 = vrot.lane.b32.xlu0 %v995, 123
        %v1001 = vpop.permute.xlu0 %1000
        %v1004 = vadd.f32 %v990, %v999
        %v1005 = vadd.f32 %v991, %v1001
        %s1006 = sld [smem:[#allocation8 + $0x37]]
        %v1007 = vstv %s1006
        %v1008 = vmul.f32 %v1007, %v928
        %v1009 = vmul.f32 %v1007, %v929
        %1012 = vrot.lane.b32.xlu0 %v1008, 122
        %v1013 = vpop.permute.xlu0 %1012
        %1014 = vrot.lane.b32.xlu0 %v1009, 122
        %v1015 = vpop.permute.xlu0 %1014
        %v1018 = vadd.f32 %v1004, %v1013
        %v1019 = vadd.f32 %v1005, %v1015
        %v1020 = vld [vmem:[%s279 + $0x1] sm:$0xff]
        %v1021 = vld [vmem:[%s279 + $0x9] sm:$0xff]
        %s1022 = sld [smem:[#allocation8 + $0x38]]
        %v1023 = vstv %s1022
        %v1024 = vmul.f32 %v1023, %v1020
        %v1025 = vmul.f32 %v1023, %v1021
        %v1026 = vadd.f32 %v1018, %v1024
        %v1027 = vadd.f32 %v1019, %v1025
        %s1028 = sld [smem:[#allocation8 + $0x39]]
        %v1029 = vstv %s1028
        %v1030 = vmul.f32 %v1029, %v1020
        %v1031 = vmul.f32 %v1029, %v1021
        %1034 = vrot.lane.b32.xlu0 %v1030, 127
        %v1035 = vpop.permute.xlu0 %1034
        %1036 = vrot.lane.b32.xlu0 %v1031, 127
        %v1037 = vpop.permute.xlu0 %1036
        %v1040 = vadd.f32 %v1026, %v1035
        %v1041 = vadd.f32 %v1027, %v1037
        %s1042 = sld [smem:[#allocation8 + $0x3a]]
        %v1043 = vstv %s1042
        %v1044 = vmul.f32 %v1043, %v1020
        %v1045 = vmul.f32 %v1043, %v1021
        %1048 = vrot.lane.b32.xlu0 %v1044, 126
        %v1049 = vpop.permute.xlu0 %1048
        %1050 = vrot.lane.b32.xlu0 %v1045, 126
        %v1051 = vpop.permute.xlu0 %1050
        %v1054 = vadd.f32 %v1040, %v1049
        %v1055 = vadd.f32 %v1041, %v1051
        %s1056 = sld [smem:[#allocation8 + $0x3b]]
        %v1057 = vstv %s1056
        %v1058 = vmul.f32 %v1057, %v1020
        %v1059 = vmul.f32 %v1057, %v1021
        %1062 = vrot.lane.b32.xlu0 %v1058, 125
        %v1063 = vpop.permute.xlu0 %1062
        %1064 = vrot.lane.b32.xlu0 %v1059, 125
        %v1065 = vpop.permute.xlu0 %1064
        %v1068 = vadd.f32 %v1054, %v1063
        %v1069 = vadd.f32 %v1055, %v1065
        %s1070 = sld [smem:[#allocation8 + $0x3c]]
        %v1071 = vstv %s1070
        %v1072 = vmul.f32 %v1071, %v1020
        %v1073 = vmul.f32 %v1071, %v1021
        %1076 = vrot.lane.b32.xlu0 %v1072, 124
        %v1077 = vpop.permute.xlu0 %1076
        %1078 = vrot.lane.b32.xlu0 %v1073, 124
        %v1079 = vpop.permute.xlu0 %1078
        %v1082 = vadd.f32 %v1068, %v1077
        %v1083 = vadd.f32 %v1069, %v1079
        %s1084 = sld [smem:[#allocation8 + $0x3d]]
        %v1085 = vstv %s1084
        %v1086 = vmul.f32 %v1085, %v1020
        %v1087 = vmul.f32 %v1085, %v1021
        %1090 = vrot.lane.b32.xlu0 %v1086, 123
        %v1091 = vpop.permute.xlu0 %1090
        %1092 = vrot.lane.b32.xlu0 %v1087, 123
        %v1093 = vpop.permute.xlu0 %1092
        %v1096 = vadd.f32 %v1082, %v1091
        %v1097 = vadd.f32 %v1083, %v1093
        %s1098 = sld [smem:[#allocation8 + $0x3e]]
        %v1099 = vstv %s1098
        %v1100 = vmul.f32 %v1099, %v1020
        %v1101 = vmul.f32 %v1099, %v1021
        %1104 = vrot.lane.b32.xlu0 %v1100, 122
        %v1105 = vpop.permute.xlu0 %1104
        %1106 = vrot.lane.b32.xlu0 %v1101, 122
        %v1107 = vpop.permute.xlu0 %1106
        %v1110 = vadd.f32 %v1096, %v1105
        %v1111 = vadd.f32 %v1097, %v1107
        %v1112 = vld [vmem:[%s279 + $0x2] sm:$0xff]
        %v1113 = vld [vmem:[%s279 + $0xa] sm:$0xff]
        %s1114 = sld [smem:[#allocation8 + $0x3f]]
        %v1115 = vstv %s1114
        %v1116 = vmul.f32 %v1115, %v1112
        %v1117 = vmul.f32 %v1115, %v1113
        %v1118 = vadd.f32 %v1110, %v1116
        %v1119 = vadd.f32 %v1111, %v1117
        %s1120 = sld [smem:[#allocation8 + $0x40]]
        %v1121 = vstv %s1120
        %v1122 = vmul.f32 %v1121, %v1112
        %v1123 = vmul.f32 %v1121, %v1113
        %1126 = vrot.lane.b32.xlu0 %v1122, 127
        %v1127 = vpop.permute.xlu0 %1126
        %1128 = vrot.lane.b32.xlu0 %v1123, 127
        %v1129 = vpop.permute.xlu0 %1128
        %v1132 = vadd.f32 %v1118, %v1127
        %v1133 = vadd.f32 %v1119, %v1129
        %s1134 = sld [smem:[#allocation8 + $0x41]]
        %v1135 = vstv %s1134
        %v1136 = vmul.f32 %v1135, %v1112
        %v1137 = vmul.f32 %v1135, %v1113
        %1140 = vrot.lane.b32.xlu0 %v1136, 126
        %v1141 = vpop.permute.xlu0 %1140
        %1142 = vrot.lane.b32.xlu0 %v1137, 126
        %v1143 = vpop.permute.xlu0 %1142
        %v1146 = vadd.f32 %v1132, %v1141
        %v1147 = vadd.f32 %v1133, %v1143
        %s1148 = sld [smem:[#allocation8 + $0x42]]
        %v1149 = vstv %s1148
        %v1150 = vmul.f32 %v1149, %v1112
        %v1151 = vmul.f32 %v1149, %v1113
        %1154 = vrot.lane.b32.xlu0 %v1150, 125
        %v1155 = vpop.permute.xlu0 %1154
        %1156 = vrot.lane.b32.xlu0 %v1151, 125
        %v1157 = vpop.permute.xlu0 %1156
        %v1160 = vadd.f32 %v1146, %v1155
        %v1161 = vadd.f32 %v1147, %v1157
        %s1162 = sld [smem:[#allocation8 + $0x43]]
        %v1163 = vstv %s1162
        %v1164 = vmul.f32 %v1163, %v1112
        %v1165 = vmul.f32 %v1163, %v1113
        %1168 = vrot.lane.b32.xlu0 %v1164, 124
        %v1169 = vpop.permute.xlu0 %1168
        %1170 = vrot.lane.b32.xlu0 %v1165, 124
        %v1171 = vpop.permute.xlu0 %1170
        %v1174 = vadd.f32 %v1160, %v1169
        %v1175 = vadd.f32 %v1161, %v1171
        %s1176 = sld [smem:[#allocation8 + $0x44]]
        %v1177 = vstv %s1176
        %v1178 = vmul.f32 %v1177, %v1112
        %v1179 = vmul.f32 %v1177, %v1113
        %1182 = vrot.lane.b32.xlu0 %v1178, 123
        %v1183 = vpop.permute.xlu0 %1182
        %1184 = vrot.lane.b32.xlu0 %v1179, 123
        %v1185 = vpop.permute.xlu0 %1184
        %v1188 = vadd.f32 %v1174, %v1183
        %v1189 = vadd.f32 %v1175, %v1185
        %s1190 = sld [smem:[#allocation8 + $0x45]]
        %v1191 = vstv %s1190
        %v1192 = vmul.f32 %v1191, %v1112
        %v1193 = vmul.f32 %v1191, %v1113
        %1196 = vrot.lane.b32.xlu0 %v1192, 122
        %v1197 = vpop.permute.xlu0 %1196
        %1198 = vrot.lane.b32.xlu0 %v1193, 122
        %v1199 = vpop.permute.xlu0 %1198
        %v1202 = vadd.f32 %v1188, %v1197
        %v1203 = vadd.f32 %v1189, %v1199
        %v1204 = vld [vmem:[%s279 + $0x3] sm:$0xff]
        %v1205 = vld [vmem:[%s279 + $0xb] sm:$0xff]
        %s1206 = sld [smem:[#allocation8 + $0x46]]
        %v1207 = vstv %s1206
        %v1208 = vmul.f32 %v1207, %v1204
        %v1209 = vmul.f32 %v1207, %v1205
        %v1210 = vadd.f32 %v1202, %v1208
        %v1211 = vadd.f32 %v1203, %v1209
        %s1212 = sld [smem:[#allocation8 + $0x47]]
        %v1213 = vstv %s1212
        %v1214 = vmul.f32 %v1213, %v1204
        %v1215 = vmul.f32 %v1213, %v1205
        %1218 = vrot.lane.b32.xlu0 %v1214, 127
        %v1219 = vpop.permute.xlu0 %1218
        %1220 = vrot.lane.b32.xlu0 %v1215, 127
        %v1221 = vpop.permute.xlu0 %1220
        %v1224 = vadd.f32 %v1210, %v1219
        %v1225 = vadd.f32 %v1211, %v1221
        %s1226 = sld [smem:[#allocation8 + $0x48]]
        %v1227 = vstv %s1226
        %v1228 = vmul.f32 %v1227, %v1204
        %v1229 = vmul.f32 %v1227, %v1205
        %1232 = vrot.lane.b32.xlu0 %v1228, 126
        %v1233 = vpop.permute.xlu0 %1232
        %1234 = vrot.lane.b32.xlu0 %v1229, 126
        %v1235 = vpop.permute.xlu0 %1234
        %v1238 = vadd.f32 %v1224, %v1233
        %v1239 = vadd.f32 %v1225, %v1235
        %s1240 = sld [smem:[#allocation8 + $0x49]]
        %v1241 = vstv %s1240
        %v1242 = vmul.f32 %v1241, %v1204
        %v1243 = vmul.f32 %v1241, %v1205
        %1246 = vrot.lane.b32.xlu0 %v1242, 125
        %v1247 = vpop.permute.xlu0 %1246
        %1248 = vrot.lane.b32.xlu0 %v1243, 125
        %v1249 = vpop.permute.xlu0 %1248
        %v1252 = vadd.f32 %v1238, %v1247
        %v1253 = vadd.f32 %v1239, %v1249
        %s1254 = sld [smem:[#allocation8 + $0x4a]]
        %v1255 = vstv %s1254
        %v1256 = vmul.f32 %v1255, %v1204
        %v1257 = vmul.f32 %v1255, %v1205
        %1260 = vrot.lane.b32.xlu0 %v1256, 124
        %v1261 = vpop.permute.xlu0 %1260
        %1262 = vrot.lane.b32.xlu0 %v1257, 124
        %v1263 = vpop.permute.xlu0 %1262
        %v1266 = vadd.f32 %v1252, %v1261
        %v1267 = vadd.f32 %v1253, %v1263
        %s1268 = sld [smem:[#allocation8 + $0x4b]]
        %v1269 = vstv %s1268
        %v1270 = vmul.f32 %v1269, %v1204
        %v1271 = vmul.f32 %v1269, %v1205
        %1274 = vrot.lane.b32.xlu0 %v1270, 123
        %v1275 = vpop.permute.xlu0 %1274
        %1276 = vrot.lane.b32.xlu0 %v1271, 123
        %v1277 = vpop.permute.xlu0 %1276
        %v1280 = vadd.f32 %v1266, %v1275
        %v1281 = vadd.f32 %v1267, %v1277
        %s1282 = sld [smem:[#allocation8 + $0x4c]]
        %v1283 = vstv %s1282
        %v1284 = vmul.f32 %v1283, %v1204
        %v1285 = vmul.f32 %v1283, %v1205
        %1288 = vrot.lane.b32.xlu0 %v1284, 122
        %v1289 = vpop.permute.xlu0 %1288
        %1290 = vrot.lane.b32.xlu0 %v1285, 122
        %v1291 = vpop.permute.xlu0 %1290
        %v1294 = vadd.f32 %v1280, %v1289
        %v1295 = vadd.f32 %v1281, %v1291
        %v1296 = vld [vmem:[%s279 + $0x4] sm:$0xff]
        %v1297 = vld [vmem:[%s279 + $0xc] sm:$0xff]
        %s1298 = sld [smem:[#allocation8 + $0x4d]]
        %v1299 = vstv %s1298
        %v1300 = vmul.f32 %v1299, %v1296
        %v1301 = vmul.f32 %v1299, %v1297
        %v1302 = vadd.f32 %v1294, %v1300
        %v1303 = vadd.f32 %v1295, %v1301
        %s1304 = sld [smem:[#allocation8 + $0x4e]]
        %v1305 = vstv %s1304
        %v1306 = vmul.f32 %v1305, %v1296
        %v1307 = vmul.f32 %v1305, %v1297
        %1310 = vrot.lane.b32.xlu0 %v1306, 127
        %v1311 = vpop.permute.xlu0 %1310
        %1312 = vrot.lane.b32.xlu0 %v1307, 127
        %v1313 = vpop.permute.xlu0 %1312
        %v1316 = vadd.f32 %v1302, %v1311
        %v1317 = vadd.f32 %v1303, %v1313
        %s1318 = sld [smem:[#allocation8 + $0x4f]]
        %v1319 = vstv %s1318
        %v1320 = vmul.f32 %v1319, %v1296
        %v1321 = vmul.f32 %v1319, %v1297
        %1324 = vrot.lane.b32.xlu0 %v1320, 126
        %v1325 = vpop.permute.xlu0 %1324
        %1326 = vrot.lane.b32.xlu0 %v1321, 126
        %v1327 = vpop.permute.xlu0 %1326
        %v1330 = vadd.f32 %v1316, %v1325
        %v1331 = vadd.f32 %v1317, %v1327
        %s1332 = sld [smem:[#allocation8 + $0x50]]
        %v1333 = vstv %s1332
        %v1334 = vmul.f32 %v1333, %v1296
        %v1335 = vmul.f32 %v1333, %v1297
        %1338 = vrot.lane.b32.xlu0 %v1334, 125
        %v1339 = vpop.permute.xlu0 %1338
        %1340 = vrot.lane.b32.xlu0 %v1335, 125
        %v1341 = vpop.permute.xlu0 %1340
        %v1344 = vadd.f32 %v1330, %v1339
        %v1345 = vadd.f32 %v1331, %v1341
        %s1346 = sld [smem:[#allocation8 + $0x51]]
        %v1347 = vstv %s1346
        %v1348 = vmul.f32 %v1347, %v1296
        %v1349 = vmul.f32 %v1347, %v1297
        %1352 = vrot.lane.b32.xlu0 %v1348, 124
        %v1353 = vpop.permute.xlu0 %1352
        %1354 = vrot.lane.b32.xlu0 %v1349, 124
        %v1355 = vpop.permute.xlu0 %1354
        %v1358 = vadd.f32 %v1344, %v1353
        %v1359 = vadd.f32 %v1345, %v1355
        %s1360 = sld [smem:[#allocation8 + $0x52]]
        %v1361 = vstv %s1360
        %v1362 = vmul.f32 %v1361, %v1296
        %v1363 = vmul.f32 %v1361, %v1297
        %1366 = vrot.lane.b32.xlu0 %v1362, 123
        %v1367 = vpop.permute.xlu0 %1366
        %1368 = vrot.lane.b32.xlu0 %v1363, 123
        %v1369 = vpop.permute.xlu0 %1368
        %v1372 = vadd.f32 %v1358, %v1367
        %v1373 = vadd.f32 %v1359, %v1369
        %s1374 = sld [smem:[#allocation8 + $0x53]]
        %v1375 = vstv %s1374
        %v1376 = vmul.f32 %v1375, %v1296
        %v1377 = vmul.f32 %v1375, %v1297
        %1380 = vrot.lane.b32.xlu0 %v1376, 122
        %v1381 = vpop.permute.xlu0 %1380
        %1382 = vrot.lane.b32.xlu0 %v1377, 122
        %v1383 = vpop.permute.xlu0 %1382
        %v1386 = vadd.f32 %v1372, %v1381
        %v1387 = vadd.f32 %v1373, %v1383
        %v1388 = vld [vmem:[%s279 + $0x5] sm:$0xff]
        %v1389 = vld [vmem:[%s279 + $0xd] sm:$0xff]
        %s1390 = sld [smem:[#allocation8 + $0x54]]
        %v1391 = vstv %s1390
        %v1392 = vmul.f32 %v1391, %v1388
        %v1393 = vmul.f32 %v1391, %v1389
        %v1394 = vadd.f32 %v1386, %v1392
        %v1395 = vadd.f32 %v1387, %v1393
        %s1396 = sld [smem:[#allocation8 + $0x55]]
        %v1397 = vstv %s1396
        %v1398 = vmul.f32 %v1397, %v1388
        %v1399 = vmul.f32 %v1397, %v1389
        %1402 = vrot.lane.b32.xlu0 %v1398, 127
        %v1403 = vpop.permute.xlu0 %1402
        %1404 = vrot.lane.b32.xlu0 %v1399, 127
        %v1405 = vpop.permute.xlu0 %1404
        %v1408 = vadd.f32 %v1394, %v1403
        %v1409 = vadd.f32 %v1395, %v1405
        %s1410 = sld [smem:[#allocation8 + $0x56]]
        %v1411 = vstv %s1410
        %v1412 = vmul.f32 %v1411, %v1388
        %v1413 = vmul.f32 %v1411, %v1389
        %1416 = vrot.lane.b32.xlu0 %v1412, 126
        %v1417 = vpop.permute.xlu0 %1416
        %1418 = vrot.lane.b32.xlu0 %v1413, 126
        %v1419 = vpop.permute.xlu0 %1418
        %v1422 = vadd.f32 %v1408, %v1417
        %v1423 = vadd.f32 %v1409, %v1419
        %s1424 = sld [smem:[#allocation8 + $0x57]]
        %v1425 = vstv %s1424
        %v1426 = vmul.f32 %v1425, %v1388
        %v1427 = vmul.f32 %v1425, %v1389
        %1430 = vrot.lane.b32.xlu0 %v1426, 125
        %v1431 = vpop.permute.xlu0 %1430
        %1432 = vrot.lane.b32.xlu0 %v1427, 125
        %v1433 = vpop.permute.xlu0 %1432
        %v1436 = vadd.f32 %v1422, %v1431
        %v1437 = vadd.f32 %v1423, %v1433
        %s1438 = sld [smem:[#allocation8 + $0x58]]
        %v1439 = vstv %s1438
        %v1440 = vmul.f32 %v1439, %v1388
        %v1441 = vmul.f32 %v1439, %v1389
        %1444 = vrot.lane.b32.xlu0 %v1440, 124
        %v1445 = vpop.permute.xlu0 %1444
        %1446 = vrot.lane.b32.xlu0 %v1441, 124
        %v1447 = vpop.permute.xlu0 %1446
        %v1450 = vadd.f32 %v1436, %v1445
        %v1451 = vadd.f32 %v1437, %v1447
        %s1452 = sld [smem:[#allocation8 + $0x59]]
        %v1453 = vstv %s1452
        %v1454 = vmul.f32 %v1453, %v1388
        %v1455 = vmul.f32 %v1453, %v1389
        %1458 = vrot.lane.b32.xlu0 %v1454, 123
        %v1459 = vpop.permute.xlu0 %1458
        %1460 = vrot.lane.b32.xlu0 %v1455, 123
        %v1461 = vpop.permute.xlu0 %1460
        %v1464 = vadd.f32 %v1450, %v1459
        %v1465 = vadd.f32 %v1451, %v1461
        %s1466 = sld [smem:[#allocation8 + $0x5a]]
        %v1467 = vstv %s1466
        %v1468 = vmul.f32 %v1467, %v1388
        %v1469 = vmul.f32 %v1467, %v1389
        %1472 = vrot.lane.b32.xlu0 %v1468, 122
        %v1473 = vpop.permute.xlu0 %1472
        %1474 = vrot.lane.b32.xlu0 %v1469, 122
        %v1475 = vpop.permute.xlu0 %1474
        %v1478 = vadd.f32 %v1464, %v1473
        %v1479 = vadd.f32 %v1465, %v1475
        %v1480 = vld [vmem:[%s279 + $0x6] sm:$0xff]
        %v1481 = vld [vmem:[%s279 + $0xe] sm:$0xff]
        %s1482 = sld [smem:[#allocation8 + $0x5b]]
        %v1483 = vstv %s1482
        %v1484 = vmul.f32 %v1483, %v1480
        %v1485 = vmul.f32 %v1483, %v1481
        %v1486 = vadd.f32 %v1478, %v1484
        %v1487 = vadd.f32 %v1479, %v1485
        %s1488 = sld [smem:[#allocation8 + $0x5c]]
        %v1489 = vstv %s1488
        %v1490 = vmul.f32 %v1489, %v1480
        %v1491 = vmul.f32 %v1489, %v1481
        %1494 = vrot.lane.b32.xlu0 %v1490, 127
        %v1495 = vpop.permute.xlu0 %1494
        %1496 = vrot.lane.b32.xlu0 %v1491, 127
        %v1497 = vpop.permute.xlu0 %1496
        %v1500 = vadd.f32 %v1486, %v1495
        %v1501 = vadd.f32 %v1487, %v1497
        %s1502 = sld [smem:[#allocation8 + $0x5d]]
        %v1503 = vstv %s1502
        %v1504 = vmul.f32 %v1503, %v1480
        %v1505 = vmul.f32 %v1503, %v1481
        %1508 = vrot.lane.b32.xlu0 %v1504, 126
        %v1509 = vpop.permute.xlu0 %1508
        %1510 = vrot.lane.b32.xlu0 %v1505, 126
        %v1511 = vpop.permute.xlu0 %1510
        %v1514 = vadd.f32 %v1500, %v1509
        %v1515 = vadd.f32 %v1501, %v1511
        %s1516 = sld [smem:[#allocation8 + $0x5e]]
        %v1517 = vstv %s1516
        %v1518 = vmul.f32 %v1517, %v1480
        %v1519 = vmul.f32 %v1517, %v1481
        %1522 = vrot.lane.b32.xlu0 %v1518, 125
        %v1523 = vpop.permute.xlu0 %1522
        %1524 = vrot.lane.b32.xlu0 %v1519, 125
        %v1525 = vpop.permute.xlu0 %1524
        %v1528 = vadd.f32 %v1514, %v1523
        %v1529 = vadd.f32 %v1515, %v1525
        %s1530 = sld [smem:[#allocation8 + $0x5f]]
        %v1531 = vstv %s1530
        %v1532 = vmul.f32 %v1531, %v1480
        %v1533 = vmul.f32 %v1531, %v1481
        %1536 = vrot.lane.b32.xlu0 %v1532, 124
        %v1537 = vpop.permute.xlu0 %1536
        %1538 = vrot.lane.b32.xlu0 %v1533, 124
        %v1539 = vpop.permute.xlu0 %1538
        %v1542 = vadd.f32 %v1528, %v1537
        %v1543 = vadd.f32 %v1529, %v1539
        %s1544 = sld [smem:[#allocation8 + $0x60]]
        %v1545 = vstv %s1544
        %v1546 = vmul.f32 %v1545, %v1480
        %v1547 = vmul.f32 %v1545, %v1481
        %1550 = vrot.lane.b32.xlu0 %v1546, 123
        %v1551 = vpop.permute.xlu0 %1550
        %1552 = vrot.lane.b32.xlu0 %v1547, 123
        %v1553 = vpop.permute.xlu0 %1552
        %v1556 = vadd.f32 %v1542, %v1551
        %v1557 = vadd.f32 %v1543, %v1553
        %s1558 = sld [smem:[#allocation8 + $0x61]]
        %v1559 = vstv %s1558
        %v1560 = vmul.f32 %v1559, %v1480
        %v1561 = vmul.f32 %v1559, %v1481
        %1564 = vrot.lane.b32.xlu0 %v1560, 122
        %v1565 = vpop.permute.xlu0 %1564
        %1566 = vrot.lane.b32.xlu0 %v1561, 122
        %v1567 = vpop.permute.xlu0 %1566
        %v1570 = vadd.f32 %v1556, %v1565
        %v1571 = vadd.f32 %v1557, %v1567
        %v1572 = vsub.f32 0.0, %v1570
        %v1573 = vsub.f32 0.0, %v1571
        %v1574 = vmul.f32 %v1572, 1.442695
        %v1575 = vpow.pop %v1574
        %v1576 = vmul.f32 %v1573, 1.442695
        %v1577 = vpow.pop %v1576
        %v1578 = vadd.f32 %v1575, 1.0
        %v1579 = vadd.f32 %v1577, 1.0
        %v1580 = vrcp.pop %v1578
        %v1581 = vmul.f32 %v1578, %v1580
        %v1582 = vsub.f32 1.0, %v1581
        %v1583 = vmul.f32 %v1580, %v1582
        %v1584 = vadd.f32 %v1580, %v1583
        %vm1585 = vweird.f32 %v1578
        %vm1586 = vweird.f32 %v1580
        %vm1587 = vmor %vm1585, %vm1586
        %v1588 = vsel %vm1587, %v1580, %v1584
        %v1589 = vand.u32 2147483647, %v1578
        %vm1590 = vcmp.eq.f32.partialorder %v1589, 8.507059e+37
        %v1591 = vand.u32 %v1578, 2147483648
        %v1592 = vor.u32 1.1754944e-38, %v1591
        %v1593 = vsel %vm1590, %v1592, %v1588
        %v1594 = vmul.f32 1.0, %v1593
        %v1595 = vrcp.pop %v1579
        %v1596 = vmul.f32 %v1579, %v1595
        %v1597 = vsub.f32 1.0, %v1596
        %v1598 = vmul.f32 %v1595, %v1597
        %v1599 = vadd.f32 %v1595, %v1598
        %vm1600 = vweird.f32 %v1579
        %vm1601 = vweird.f32 %v1595
        %vm1602 = vmor %vm1600, %vm1601
        %v1603 = vsel %vm1602, %v1595, %v1599
        %v1604 = vand.u32 2147483647, %v1579
        %vm1605 = vcmp.eq.f32.partialorder %v1604, 8.507059e+37
        %v1606 = vand.u32 %v1579, 2147483648
        %v1607 = vor.u32 1.1754944e-38, %v1606
        %v1608 = vsel %vm1605, %v1607, %v1603
        %v1609 = vmul.f32 1.0, %v1608
        %v1610 = vmul.f32 %v206, %v1594
        %v1611 = vmul.f32 %v207, %v1609
        %v1612 = vmul.f32 %v208, %v1594
        %v1613 = vmul.f32 %v209, %v1609
        %v1614 = vmul.f32 %v210, %v1594
        %v1615 = vmul.f32 %v211, %v1609
        %v1616 = vmul.f32 %v212, %v1594
        %v1617 = vmul.f32 %v213, %v1609
        %1618 = vst.msk [vmem:[%s205] sm:$0xff] %vm214, %v1610
        %1619 = vst.msk [vmem:[%s205 + $0x8] sm:$0xff] %vm214, %v1611
        %1620 = vst.msk [vmem:[%s205 + $0x10] sm:$0xff] %vm214, %v1612
        %1621 = vst.msk [vmem:[%s205 + $0x18] sm:$0xff] %vm214, %v1613
        %1622 = vst.msk [vmem:[%s205 + $0x20] sm:$0xff] %vm214, %v1614
        %1623 = vst.msk [vmem:[%s205 + $0x28] sm:$0xff] %vm214, %v1615
        %1624 = vst.msk [vmem:[%s205 + $0x30] sm:$0xff] %vm214, %v1616
        %1625 = vst.msk [vmem:[%s205 + $0x38] sm:$0xff] %vm214, %v1617
        %s1626 = sand.u32 %s98, 1
        %s1627 = scalar_lea.sflag [#allocation6], %s1626
        %s1628 = sand.u32 %s98, 1
        %s1629 = smul.addr %s1628, 64
        %s1630 = scalar_lea.vmem [#allocation9], %s1629
        // Predicated region
        $region41: #{tpu_custom_call.1} parent=31 // pred_check
          %p1631 = pneg %p108
        $region42: #{tpu_custom_call.1} parent=31 // pred_check_branch
          %1633 = sbr.rel (%p1631) target = $region44
        $region43: #{tpu_custom_call.1} parent=31 // pred_region
          %1635 = vsyncadd %s1627, 0
          %s1636 = smul.addr %s22, 8
          %s1637 = smul.addr %s1636, 8
          %s1638 = scalar_lea.hbm %s3, %s1637
          %s1639 = sshll.u32 %s1630, 4
          %s1640 = int_to_ptr.vmem [resolvable:$true] %s1639
          %s1641 = sshll.u32 %s1638, 4
          %s1642 = int_to_ptr.hbm [resolvable:$true] %s1641
          %1647 = dma.vmem_to_hbm [thread:$0]  %s1640, 1024, %s1642, %s1627, 128, 128, 8
        $region44: #{tpu_custom_call.1} parent=31 // pred_fallthru
          _
      $region32: #{tpu_custom_call.1} parent=5 // pred_fallthru
        _
      %p1648 = scmp.le.s32.totalorder 2, %s17
      // Predicated region
      $region45: #{tpu_custom_call.1} parent=5 // pred_check
        %p1649 = pneg %p1648
      $region46: #{tpu_custom_call.1} parent=5 // pred_check_branch
        %1651 = sbr.rel (%p1649) target = $region48
      $region47: #{tpu_custom_call.1} parent=5 // pred_region
        %s1652 = ssub.s32 %s17, 2
        // Predicated region
        $region49: #{tpu_custom_call.1} parent=47 // pred_check
          %p1653 = pneg %p114
        $region50: #{tpu_custom_call.1} parent=47 // pred_check_branch
          %1655 = sbr.rel (%p1653) target = $region52
        $region51: #{tpu_custom_call.1} parent=47 // pred_region
          %s1656 = sand.u32 %s99, 1
          %s1657 = scalar_lea.sflag [#allocation6], %s1656
          %s1658 = sand.u32 %s99, 1
          %s1659 = smul.addr %s1658, 64
          %s1660 = scalar_lea.vmem [#allocation9], %s1659
          %1662 = dma.done %s1657, 1024
        $region52: #{tpu_custom_call.1} parent=47 // pred_fallthru
          _
      $region48: #{tpu_custom_call.1} parent=5 // pred_fallthru
        _
    $region6: #{tpu_custom_call.1} parent=1 // loop_footer
      %s21 = sadd.s32 1, %s17
    $region7: #{tpu_custom_call.1} parent=1 // loop_footer_branch
      %16 = sbr.rel target = $region3
    $region8: #{tpu_custom_call.1} parent=1 // loop_exit
      _
    %1663 = vsyncpa [#allocation5], 1
    %s1664 = scalar_lea.sflag [#allocation5], 1
    %1665 = vsyncpa %s1664, 1
    %1666 = vsyncpa [#allocation6], 1
    %s1667 = scalar_lea.sflag [#allocation6], 1
    %1668 = vsyncpa %s1667, 1
    %1669 = vsyncpa [#allocation7], 1
    %s1670 = scalar_lea.sflag [#allocation7], 1
    %1671 = vsyncpa %s1670, 1

</llo_original>
